<compile_context>
chip_gen: v5e
topology: v5e:2x2
jax: 0.10.0
libtpu: 0.0.40
codegen_flags: <defaults>
</compile_context>

<pallas_src>
import functools

import jax
import jax.numpy as jnp
from jax import lax
from jax.experimental import pallas as pl
from jax.experimental.pallas import tpu as pltpu

HEADS = 4
DC = 32                      # num_head_channels
HIDDEN = HEADS * DC          # 128
EPS = 1e-5                   # GroupNorm eps (PyTorch default)


def cross_linear_attention_kernel(
        x_ref, y_ref, wq_ref, wkv_ref, wo_ref, mask_ref, aff_ref,   # inputs
        o_ref,                                                      # output
        m_scr, l_scr, ctx_scr, proj_scr,                            # scratch
        *, heads, dc, chunk, num_chunks, eps):
    hidden = heads * dc
    C = x_ref.shape[0]
    N = x_ref.shape[1]

    # Per-batch accumulator init (scratch persists across grid steps).
    m_scr[...] = jnp.full_like(m_scr, -jnp.inf)
    l_scr[...] = jnp.zeros_like(l_scr)
    ctx_scr[...] = jnp.zeros_like(ctx_scr)

    # ---- Phase A: stream k/v over N chunks; k softmax (over tokens) with a
    # flash-style running max/sum and a row-rescaled context accumulator. -----
    @pl.loop(0, num_chunks)
    def _(i):
        off = pl.multiple_of(i * chunk, chunk)
        y_c = y_ref[:, pl.ds(off, chunk)].astype(jnp.bfloat16)          # (C, chunk)
        kv = jnp.dot(wkv_ref[...], y_c,
                     preferred_element_type=jnp.float32)                # (2*hidden, chunk)
        k = kv[:hidden]
        v = kv[hidden:]
        m_prev = m_scr[...]                                             # (hidden, 1)
        m_new = jnp.maximum(m_prev, jnp.max(k, axis=-1, keepdims=True))
        alpha = jnp.exp(m_prev - m_new)                                 # (hidden, 1)
        ke = jnp.exp(k - m_new)                                         # (hidden, chunk)
        l_scr[...] = alpha * l_scr[...] + jnp.sum(ke, axis=-1, keepdims=True)
        # ctx[c, c'] accumulates sum_n ke[c, n] * v[c', n]  (bf16 MXU, f32 acc).
        ctx_scr[...] = alpha * ctx_scr[...] + lax.dot_general(
            ke.astype(jnp.bfloat16), v.astype(jnp.bfloat16),
            (((1,), (1,)), ((), ())), preferred_element_type=jnp.float32)
        m_scr[...] = m_new

    # Finalize context: normalize rows by the k-softmax denominator, zero the
    # cross-head blocks and fold in the q scale (mask = scale * same_head),
    # then fuse the output projection:
    #   Wo @ (ctx_m^T @ q_sm) == (Wo @ ctx_m^T) @ q_sm == W2 @ q_sm.
    inv_l = pl.reciprocal(l_scr[...], approx=True)                      # (hidden, 1)
    ctx_m = ctx_scr[...] * inv_l * mask_ref[...]                        # (hidden, hidden)
    w2 = lax.dot_general(wo_ref[...], ctx_m, (((1,), (1,)), ((), ())),
                         preferred_element_type=jnp.float32)            # (C, hidden)
    w2_bf = w2.astype(jnp.bfloat16)
    bo = aff_ref[:, 0:1]                                                # (C, 1)

    # ---- Phase B: stream q over N chunks; per-head q softmax (over dc
    # channels) + fused projection into the tiny (C, N) proj buffer. ---------
    @pl.loop(0, num_chunks)
    def _(i):
        off = pl.multiple_of(i * chunk, chunk)
        x_c = x_ref[:, pl.ds(off, chunk)].astype(jnp.bfloat16)          # (C, chunk)
        q = jnp.dot(wq_ref[...], x_c,
                    preferred_element_type=jnp.float32)                 # (hidden, chunk)
        q3 = q.reshape(heads, dc, chunk)
        q_max = jnp.max(q3, axis=1, keepdims=True)                      # per-head max
        qe = jnp.exp(q3 - q_max)
        q_den = jnp.sum(qe, axis=1, keepdims=True)                      # (heads, 1, chunk)
        q_sm = (qe * pl.reciprocal(q_den, approx=True)).reshape(hidden, chunk)
        proj_c = jnp.dot(w2_bf, q_sm.astype(jnp.bfloat16),
                         preferred_element_type=jnp.float32) + bo       # (C, chunk)
        proj_scr[:, pl.ds(off, chunk)] = proj_c

    # ---- GroupNorm(num_groups=1) over all C*N values + residual. -----------
    proj = proj_scr[...]                                                # (C, N)
    inv_cn = 1.0 / (C * N)
    s = jnp.sum(proj)
    s2 = jnp.sum(proj * proj)
    mean = s * inv_cn
    var = s2 * inv_cn - mean * mean
    inv_std = lax.rsqrt(var + eps)
    gamma = aff_ref[:, 1:2]
    beta = aff_ref[:, 2:3]
    o_ref[...] = ((proj - mean) * inv_std * gamma + beta
                  + x_ref[...]).astype(o_ref.dtype)


def cross_linear_attention(x_nchw, y_nchw, params, heads=HEADS, dc=DC):
    B, C, H, W = x_nchw.shape
    N = H * W
    hidden = heads * dc
    scale = dc ** (-0.5)

    # TODO(synk): support N not a multiple of 128 (needs pad-lane masking in
    # the k-softmax / GroupNorm lane reductions).
    assert N % 128 == 0, "H*W must be a multiple of 128 for lane-dense blocks"

    # In-kernel token chunk (lane-aligned); bounds VMEM for large feature maps.
    if N <= 2048:
        chunk = N
    else:
        chunk = next(c for c in (2048, 1536, 1024, 512, 256, 128) if N % c == 0)
    num_chunks = N // chunk

    # NCHW flattened to channel-major (B, C, N): contiguous, free reshape.
    x_cm = x_nchw.reshape(B, C, N)
    y_cm = y_nchw.reshape(B, C, N)

    # Weights: Wq and fused Wk|Wv pre-cast to bf16 (MXU operands, f32 acc).
    wq = params["wq"].astype(jnp.bfloat16)                              # (hidden, C)
    wkv = jnp.concatenate([params["wk"], params["wv"]],
                          axis=0).astype(jnp.bfloat16)                  # (2*hidden, C)
    wo = params["wo"].astype(jnp.float32)                               # (C, hidden)

    # Block-diagonal head mask with the q scale folded in (hoisted, constant).
    hh = jnp.arange(hidden) // dc
    mask = jnp.where(hh[:, None] == hh[None, :], scale, 0.0).astype(jnp.float32)

    # bo | gamma | beta packed into one (C, 3) block.
    aff = jnp.stack([params["bo"], params["gamma"], params["beta"]],
                    axis=1).astype(jnp.float32)

    kernel = functools.partial(cross_linear_attention_kernel,
                               heads=heads, dc=dc, chunk=chunk,
                               num_chunks=num_chunks, eps=EPS)

    batch_spec = pl.BlockSpec((None, C, N), lambda b: (b, 0, 0))

    out_cm = pl.pallas_call(
        kernel,
        out_shape=jax.ShapeDtypeStruct((B, C, N), x_nchw.dtype),
        grid_spec=pltpu.PrefetchScalarGridSpec(
            num_scalar_prefetch=0,
            grid=(B,),
            in_specs=[
                batch_spec,                                        # x  (C, N)
                batch_spec,                                        # y  (C, N)
                pl.BlockSpec((hidden, C), lambda b: (0, 0)),       # Wq  (bf16)
                pl.BlockSpec((2 * hidden, C), lambda b: (0, 0)),   # Wk|Wv (bf16)
                pl.BlockSpec((C, hidden), lambda b: (0, 0)),       # Wo  (f32)
                pl.BlockSpec((hidden, hidden), lambda b: (0, 0)),  # head mask * scale
                pl.BlockSpec((C, 3), lambda b: (0, 0)),            # bo|gamma|beta
            ],
            out_specs=batch_spec,
            scratch_shapes=[
                pltpu.VMEM((hidden, 1), jnp.float32),              # running k max
                pltpu.VMEM((hidden, 1), jnp.float32),              # running k exp-sum
                pltpu.VMEM((hidden, hidden), jnp.float32),         # ctx accumulator
                pltpu.VMEM((C, N), jnp.float32),                   # proj buffer (tiny C)
            ],
        ),
        compiler_params=pltpu.CompilerParams(
            dimension_semantics=("parallel",),
            # Working set per step is a few (hidden, chunk) f32/bf16 tiles plus
            # the tiny (C, N) slabs; 32 MiB fits every generation incl. v7x.
            vmem_limit_bytes=32 * 1024 * 1024,
        ),
    )(x_cm, y_cm, wq, wkv, wo, mask, aff)

    return out_cm.reshape(B, C, H, W)


def reference(x, y, params, heads=HEADS, dc=DC):
    """Pure-JAX f32 mirror of the PyTorch forward (NCHW), for validation."""
    B, C, H, W = x.shape
    N = H * W
    scale = dc ** (-0.5)

    def conv1x1(inp, w):                      # w: (out, in)
        return jnp.einsum('bchw,oc->bohw', inp, w)

    q = conv1x1(x, params["wq"]).reshape(B * heads, dc, N)
    k = conv1x1(y, params["wk"]).reshape(B * heads, dc, N)
    v = conv1x1(y, params["wv"]).reshape(B * heads, dc, N)
    q = jax.nn.softmax(q, axis=-2) * scale
    k = jax.nn.softmax(k, axis=-1)
    context = jnp.einsum('bcn,bdn->bcd', k, v)          # bmm(k, v^T)
    output = jnp.einsum('bcd,bcn->bdn', context, q)     # bmm(context^T, q)
    output = output.reshape(B, heads * dc, H, W)
    out = conv1x1(output, params["wo"]) + params["bo"].reshape(1, C, 1, 1)
    mean = out.mean(axis=(1, 2, 3), keepdims=True)
    var = ((out - mean) ** 2).mean(axis=(1, 2, 3), keepdims=True)
    gn = ((out - mean) / jnp.sqrt(var + EPS)
          * params["gamma"].reshape(1, C, 1, 1) + params["beta"].reshape(1, C, 1, 1))
    return gn + x


if __name__ == "__main__":
    B, DIM, H, W = 2, 4, 16, 16
    key = jax.random.PRNGKey(0)
    kx, ky, k1, k2, k3, k4, k5, k6, k7 = jax.random.split(key, 9)

    x = jax.random.normal(kx, (B, DIM, H, W), dtype=jnp.float32)
    y = jax.random.normal(ky, (B, DIM, H, W), dtype=jnp.float32)

    params = {
        "wq": 0.2 * jax.random.normal(k1, (HIDDEN, DIM), dtype=jnp.float32),
        "wk": 0.2 * jax.random.normal(k2, (HIDDEN, DIM), dtype=jnp.float32),
        "wv": 0.2 * jax.random.normal(k3, (HIDDEN, DIM), dtype=jnp.float32),
        "wo": 0.2 * jax.random.normal(k4, (DIM, HIDDEN), dtype=jnp.float32),
        "bo": 0.1 * jax.random.normal(k5, (DIM,), dtype=jnp.float32),
        "gamma": 1.0 + 0.1 * jax.random.normal(k6, (DIM,), dtype=jnp.float32),
        "beta": 0.1 * jax.random.normal(k7, (DIM,), dtype=jnp.float32),
    }

    out = jax.block_until_ready(cross_linear_attention(x, y, params))
    ref = jax.block_until_ready(reference(x, y, params))

    assert out.shape == (B, DIM, H, W)
    # Tolerance accounts for bf16 MXU operands (f32 accumulation) and the EUP
    # approx reciprocal in the softmax denominators (~1e-4 rel).
    assert jnp.allclose(out, ref, rtol=1e-2, atol=1e-2), (
        float(jnp.max(jnp.abs(out - ref))))

    print("KERNEL_OK")
</pallas_src>

<mosaic_0001>
module attributes {stable_mosaic.version = 11 : i64} {
  func.func @cross_linear_attention_kernel(%arg0: i32, %arg1: memref<1x4x256xf32, #tpu.memory_space<vmem>>, %arg2: memref<1x4x256xf32, #tpu.memory_space<vmem>>, %arg3: memref<128x4xbf16, #tpu.memory_space<vmem>>, %arg4: memref<256x4xbf16, #tpu.memory_space<vmem>>, %arg5: memref<4x128xf32, #tpu.memory_space<vmem>>, %arg6: memref<128x128xf32, #tpu.memory_space<vmem>>, %arg7: memref<4x3xf32, #tpu.memory_space<vmem>>, %arg8: memref<1x4x256xf32, #tpu.memory_space<vmem>>, %arg9: memref<128x1xf32, #tpu.memory_space<vmem>>, %arg10: memref<128x1xf32, #tpu.memory_space<vmem>>, %arg11: memref<128x128xf32, #tpu.memory_space<vmem>>, %arg12: memref<4x256xf32, #tpu.memory_space<vmem>>) attributes {dimension_semantics = [#tpu.dimension_semantics<parallel>], iteration_bounds = array<i64: 2>, scalar_prefetch = 0 : i64, scratch_operands = 4 : i64, tpu.core_type = #tpu.core_type<tc>, window_params = [{transform_indices = @transform_0, window_bounds = array<i64: 1, 4, 256>}, {transform_indices = @transform_1, window_bounds = array<i64: 1, 4, 256>}, {pipeline_mode = #tpu.pipeline_mode<synchronous>, transform_indices = @transform_2, window_bounds = array<i64: 128, 4>}, {pipeline_mode = #tpu.pipeline_mode<synchronous>, transform_indices = @transform_3, window_bounds = array<i64: 256, 4>}, {pipeline_mode = #tpu.pipeline_mode<synchronous>, transform_indices = @transform_4, window_bounds = array<i64: 4, 128>}, {pipeline_mode = #tpu.pipeline_mode<synchronous>, transform_indices = @transform_5, window_bounds = array<i64: 128, 128>}, {pipeline_mode = #tpu.pipeline_mode<synchronous>, transform_indices = @transform_6, window_bounds = array<i64: 4, 3>}, {transform_indices = @transform_7, window_bounds = array<i64: 1, 4, 256>}]} {
    %cst = arith.constant 0xFF800000 : f32
    %0 = vector.broadcast %cst : f32 to vector<128x1xf32>
    %c0 = arith.constant 0 : index
    %c0_0 = arith.constant 0 : index
    %1 = vector.load %arg9[%c0, %c0_0] : memref<128x1xf32, #tpu.memory_space<vmem>>, vector<128x1xf32>
    tpu.vector_store %arg9[%c0, %c0_0], %0 {strides = array<i32>} : memref<128x1xf32, #tpu.memory_space<vmem>>, vector<128x1xf32>,
    %cst_1 = arith.constant 0.000000e+00 : f32
    %2 = vector.broadcast %cst_1 : f32 to vector<128x1xf32>
    %c0_2 = arith.constant 0 : index
    %c0_3 = arith.constant 0 : index
    %3 = vector.load %arg10[%c0_2, %c0_3] : memref<128x1xf32, #tpu.memory_space<vmem>>, vector<128x1xf32>
    tpu.vector_store %arg10[%c0_2, %c0_3], %2 {strides = array<i32>} : memref<128x1xf32, #tpu.memory_space<vmem>>, vector<128x1xf32>,
    %cst_4 = arith.constant 0.000000e+00 : f32
    %4 = vector.broadcast %cst_4 : f32 to vector<128x128xf32>
    %c0_5 = arith.constant 0 : index
    %c0_6 = arith.constant 0 : index
    %5 = vector.load %arg11[%c0_5, %c0_6] : memref<128x128xf32, #tpu.memory_space<vmem>>, vector<128x128xf32>
    tpu.vector_store %arg11[%c0_5, %c0_6], %4 {strides = array<i32>} : memref<128x128xf32, #tpu.memory_space<vmem>>, vector<128x128xf32>,
    %c0_i32 = arith.constant 0 : i32
    %c1_i32 = arith.constant 1 : i32
    %6 = arith.muli %c0_i32, %c1_i32 : i32
    %c0_i32_7 = arith.constant 0 : i32
    %7 = arith.addi %c0_i32_7, %6 : i32
    %c256_i32 = arith.constant 256 : i32
    %8 = arith.muli %7, %c256_i32 : i32
    %9 = tpu.assume_multiple %8, 256 : i32
    %c0_8 = arith.constant 0 : index
    %c0_9 = arith.constant 0 : index
    %10 = arith.index_cast %9 : i32 to index
    %11 = vector.load %arg2[%c0_8, %c0_9, %10] : memref<1x4x256xf32, #tpu.memory_space<vmem>>, vector<1x4x256xf32>
    %12 = vector.shape_cast %11 : vector<1x4x256xf32> to vector<4x256xf32>
    %13 = arith.truncf %12 : vector<4x256xf32> to vector<4x256xbf16>
    %c0_10 = arith.constant 0 : index
    %c0_11 = arith.constant 0 : index
    %14 = vector.load %arg4[%c0_10, %c0_11] : memref<256x4xbf16, #tpu.memory_space<vmem>>, vector<256x4xbf16>
    %cst_12 = arith.constant dense<0.000000e+00> : vector<256x256xf32>
    %15 = tpu.matmul %14, %13, %cst_12 {dimension_numbers = #tpu.dot_dimension_numbers<[1], [0], [0], [1], [0, 0, 1, 1], [], []>} : vector<256x4xbf16>, vector<4x256xbf16>, vector<256x256xf32> -> vector<256x256xf32>
    %16 = vector.extract_strided_slice %15 {offsets = [0, 0], sizes = [128, 256], strides = [1, 1]} : vector<256x256xf32> to vector<128x256xf32>
    %17 = vector.extract_strided_slice %15 {offsets = [128, 0], sizes = [128, 256], strides = [1, 1]} : vector<256x256xf32> to vector<128x256xf32>
    %c0_13 = arith.constant 0 : index
    %c0_14 = arith.constant 0 : index
    %18 = vector.load %arg9[%c0_13, %c0_14] : memref<128x1xf32, #tpu.memory_space<vmem>>, vector<128x1xf32>
    %cst_15 = arith.constant dense<0xFF800000> : vector<128xf32>
    %19 = vector.multi_reduction <maximumf>, %16, %cst_15 [1] : vector<128x256xf32> to vector<128xf32>
    %20 = vector.shape_cast %19 : vector<128xf32> to vector<128x1xf32>
    %21 = arith.maximumf %18, %20 : vector<128x1xf32>
    %22 = arith.subf %18, %21 : vector<128x1xf32>
    %23 = math.exp %22 : vector<128x1xf32>
    %24 = vector.broadcast %21 : vector<128x1xf32> to vector<128x256xf32>
    %25 = arith.subf %16, %24 : vector<128x256xf32>
    %26 = math.exp %25 : vector<128x256xf32>
    %c0_16 = arith.constant 0 : index
    %c0_17 = arith.constant 0 : index
    %27 = vector.load %arg10[%c0_16, %c0_17] : memref<128x1xf32, #tpu.memory_space<vmem>>, vector<128x1xf32>
    %28 = arith.mulf %23, %27 : vector<128x1xf32>
    %cst_18 = arith.constant dense<0.000000e+00> : vector<128xf32>
    %29 = vector.multi_reduction <add>, %26, %cst_18 [1] : vector<128x256xf32> to vector<128xf32>
    %30 = vector.shape_cast %29 : vector<128xf32> to vector<128x1xf32>
    %31 = arith.addf %28, %30 : vector<128x1xf32>
    %c0_19 = arith.constant 0 : index
    %c0_20 = arith.constant 0 : index
    %32 = vector.load %arg10[%c0_19, %c0_20] : memref<128x1xf32, #tpu.memory_space<vmem>>, vector<128x1xf32>
    tpu.vector_store %arg10[%c0_19, %c0_20], %31 {strides = array<i32>} : memref<128x1xf32, #tpu.memory_space<vmem>>, vector<128x1xf32>,
    %c0_21 = arith.constant 0 : index
    %c0_22 = arith.constant 0 : index
    %33 = vector.load %arg11[%c0_21, %c0_22] : memref<128x128xf32, #tpu.memory_space<vmem>>, vector<128x128xf32>
    %34 = vector.broadcast %23 : vector<128x1xf32> to vector<128x128xf32>
    %35 = arith.mulf %34, %33 : vector<128x128xf32>
    %36 = arith.truncf %26 : vector<128x256xf32> to vector<128x256xbf16>
    %37 = arith.truncf %17 : vector<128x256xf32> to vector<128x256xbf16>
    %cst_23 = arith.constant dense<0.000000e+00> : vector<128x128xf32>
    %38 = tpu.matmul %36, %37, %cst_23 {dimension_numbers = #tpu.dot_dimension_numbers<[1], [1], [0], [0], [0, 0, 1, 0], [], []>} : vector<128x256xbf16>, vector<128x256xbf16>, vector<128x128xf32> -> vector<128x128xf32>
    %39 = arith.addf %35, %38 : vector<128x128xf32>
    %c0_24 = arith.constant 0 : index
    %c0_25 = arith.constant 0 : index
    %40 = vector.load %arg11[%c0_24, %c0_25] : memref<128x128xf32, #tpu.memory_space<vmem>>, vector<128x128xf32>
    tpu.vector_store %arg11[%c0_24, %c0_25], %39 {strides = array<i32>} : memref<128x128xf32, #tpu.memory_space<vmem>>, vector<128x128xf32>,
    %c0_26 = arith.constant 0 : index
    %c0_27 = arith.constant 0 : index
    %41 = vector.load %arg9[%c0_26, %c0_27] : memref<128x1xf32, #tpu.memory_space<vmem>>, vector<128x1xf32>
    tpu.vector_store %arg9[%c0_26, %c0_27], %21 {strides = array<i32>} : memref<128x1xf32, #tpu.memory_space<vmem>>, vector<128x1xf32>,
    %c1_i32_28 = arith.constant 1 : i32
    %c0_29 = arith.constant 0 : index
    %c0_30 = arith.constant 0 : index
    %42 = vector.load %arg10[%c0_29, %c0_30] : memref<128x1xf32, #tpu.memory_space<vmem>>, vector<128x1xf32>
    %43 = tpu.reciprocal %42 {approx = true} : vector<128x1xf32> -> vector<128x1xf32>
    %c0_31 = arith.constant 0 : index
    %c0_32 = arith.constant 0 : index
    %44 = vector.load %arg11[%c0_31, %c0_32] : memref<128x128xf32, #tpu.memory_space<vmem>>, vector<128x128xf32>
    %45 = vector.broadcast %43 : vector<128x1xf32> to vector<128x128xf32>
    %46 = arith.mulf %44, %45 : vector<128x128xf32>
    %c0_33 = arith.constant 0 : index
    %c0_34 = arith.constant 0 : index
    %47 = vector.load %arg6[%c0_33, %c0_34] : memref<128x128xf32, #tpu.memory_space<vmem>>, vector<128x128xf32>
    %48 = arith.mulf %46, %47 : vector<128x128xf32>
    %c0_35 = arith.constant 0 : index
    %c0_36 = arith.constant 0 : index
    %49 = vector.load %arg5[%c0_35, %c0_36] : memref<4x128xf32, #tpu.memory_space<vmem>>, vector<4x128xf32>
    %cst_37 = arith.constant dense<0.000000e+00> : vector<4x128xf32>
    %50 = tpu.matmul %49, %48, %cst_37 {dimension_numbers = #tpu.dot_dimension_numbers<[1], [1], [0], [0], [0, 0, 1, 0], [], []>} : vector<4x128xf32>, vector<128x128xf32>, vector<4x128xf32> -> vector<4x128xf32>
    %51 = arith.truncf %50 : vector<4x128xf32> to vector<4x128xbf16>
    %c0_38 = arith.constant 0 : index
    %c0_39 = arith.constant 0 : index
    %52 = vector.load %arg7[%c0_38, %c0_39] : memref<4x3xf32, #tpu.memory_space<vmem>>, vector<4x1xf32>
    %c0_i32_40 = arith.constant 0 : i32
    %c1_i32_41 = arith.constant 1 : i32
    %53 = arith.muli %c0_i32_40, %c1_i32_41 : i32
    %c0_i32_42 = arith.constant 0 : i32
    %54 = arith.addi %c0_i32_42, %53 : i32
    %c256_i32_43 = arith.constant 256 : i32
    %55 = arith.muli %54, %c256_i32_43 : i32
    %56 = tpu.assume_multiple %55, 256 : i32
    %c0_44 = arith.constant 0 : index
    %c0_45 = arith.constant 0 : index
    %57 = arith.index_cast %56 : i32 to index
    %58 = vector.load %arg1[%c0_44, %c0_45, %57] : memref<1x4x256xf32, #tpu.memory_space<vmem>>, vector<1x4x256xf32>
    %59 = vector.shape_cast %58 : vector<1x4x256xf32> to vector<4x256xf32>
    %60 = arith.truncf %59 : vector<4x256xf32> to vector<4x256xbf16>
    %c0_46 = arith.constant 0 : index
    %c0_47 = arith.constant 0 : index
    %61 = vector.load %arg3[%c0_46, %c0_47] : memref<128x4xbf16, #tpu.memory_space<vmem>>, vector<128x4xbf16>
    %cst_48 = arith.constant dense<0.000000e+00> : vector<128x256xf32>
    %62 = tpu.matmul %61, %60, %cst_48 {dimension_numbers = #tpu.dot_dimension_numbers<[1], [0], [0], [1], [0, 0, 1, 1], [], []>} : vector<128x4xbf16>, vector<4x256xbf16>, vector<128x256xf32> -> vector<128x256xf32>
    %63 = vector.shape_cast %62 : vector<128x256xf32> to vector<4x32x256xf32>
    %cst_49 = arith.constant dense<0xFF800000> : vector<4x256xf32>
    %64 = vector.multi_reduction <maximumf>, %63, %cst_49 [1] : vector<4x32x256xf32> to vector<4x256xf32>
    %65 = vector.shape_cast %64 : vector<4x256xf32> to vector<4x1x256xf32>
    %66 = vector.broadcast %65 : vector<4x1x256xf32> to vector<4x32x256xf32>
    %67 = arith.subf %63, %66 : vector<4x32x256xf32>
    %68 = math.exp %67 : vector<4x32x256xf32>
    %cst_50 = arith.constant dense<0.000000e+00> : vector<4x256xf32>
    %69 = vector.multi_reduction <add>, %68, %cst_50 [1] : vector<4x32x256xf32> to vector<4x256xf32>
    %70 = vector.shape_cast %69 : vector<4x256xf32> to vector<4x1x256xf32>
    %71 = tpu.reciprocal %70 {approx = true} : vector<4x1x256xf32> -> vector<4x1x256xf32>
    %72 = vector.broadcast %71 : vector<4x1x256xf32> to vector<4x32x256xf32>
    %73 = arith.mulf %68, %72 : vector<4x32x256xf32>
    %74 = vector.shape_cast %73 : vector<4x32x256xf32> to vector<128x256xf32>
    %75 = arith.truncf %74 : vector<128x256xf32> to vector<128x256xbf16>
    %cst_51 = arith.constant dense<0.000000e+00> : vector<4x256xf32>
    %76 = tpu.matmul %51, %75, %cst_51 {dimension_numbers = #tpu.dot_dimension_numbers<[1], [0], [0], [1], [0, 0, 1, 1], [], []>} : vector<4x128xbf16>, vector<128x256xbf16>, vector<4x256xf32> -> vector<4x256xf32>
    %77 = vector.broadcast %52 : vector<4x1xf32> to vector<4x256xf32>
    %78 = arith.addf %76, %77 : vector<4x256xf32>
    %c0_52 = arith.constant 0 : index
    %79 = arith.index_cast %56 : i32 to index
    %80 = vector.load %arg12[%c0_52, %79] : memref<4x256xf32, #tpu.memory_space<vmem>>, vector<4x256xf32>
    tpu.vector_store %arg12[%c0_52, %79], %78 {strides = array<i32>} : memref<4x256xf32, #tpu.memory_space<vmem>>, vector<4x256xf32>,
    %c1_i32_53 = arith.constant 1 : i32
    %c0_54 = arith.constant 0 : index
    %c0_55 = arith.constant 0 : index
    %81 = vector.load %arg12[%c0_54, %c0_55] : memref<4x256xf32, #tpu.memory_space<vmem>>, vector<4x256xf32>
    %82 = vector.shape_cast %81 : vector<4x256xf32> to vector<1x4x256xf32>
    %cst_56 = arith.constant dense<0.000000e+00> : vector<1xf32>
    %83 = vector.multi_reduction <add>, %82, %cst_56 [1, 2] : vector<1x4x256xf32> to vector<1xf32>
    %84 = vector.shape_cast %83 : vector<1xf32> to vector<1x1x1xf32>
    %85 = vector.extract %84[0, 0, 0] : f32 from vector<1x1x1xf32>
    %86 = arith.mulf %81, %81 : vector<4x256xf32>
    %87 = vector.shape_cast %86 : vector<4x256xf32> to vector<1x4x256xf32>
    %cst_57 = arith.constant dense<0.000000e+00> : vector<1xf32>
    %88 = vector.multi_reduction <add>, %87, %cst_57 [1, 2] : vector<1x4x256xf32> to vector<1xf32>
    %89 = vector.shape_cast %88 : vector<1xf32> to vector<1x1x1xf32>
    %90 = vector.extract %89[0, 0, 0] : f32 from vector<1x1x1xf32>
    %cst_58 = arith.constant 9.765625E-4 : f32
    %91 = arith.mulf %85, %cst_58 : f32
    %cst_59 = arith.constant 9.765625E-4 : f32
    %92 = arith.mulf %90, %cst_59 : f32
    %93 = arith.mulf %91, %91 : f32
    %94 = arith.subf %92, %93 : f32
    %cst_60 = arith.constant 9.99999974E-6 : f32
    %95 = arith.addf %94, %cst_60 : f32
    %96 = math.rsqrt %95 : f32
    %c0_61 = arith.constant 0 : index
    %c1 = arith.constant 1 : index
    %97 = vector.load %arg7[%c0_61, %c1] : memref<4x3xf32, #tpu.memory_space<vmem>>, vector<4x1xf32>
    %c0_62 = arith.constant 0 : index
    %c2 = arith.constant 2 : index
    %98 = vector.load %arg7[%c0_62, %c2] : memref<4x3xf32, #tpu.memory_space<vmem>>, vector<4x1xf32>
    %99 = vector.broadcast %91 : f32 to vector<4x256xf32>
    %100 = arith.subf %81, %99 : vector<4x256xf32>
    %101 = vector.broadcast %96 : f32 to vector<4x256xf32>
    %102 = arith.mulf %100, %101 : vector<4x256xf32>
    %103 = vector.broadcast %97 : vector<4x1xf32> to vector<4x256xf32>
    %104 = arith.mulf %102, %103 : vector<4x256xf32>
    %105 = vector.broadcast %98 : vector<4x1xf32> to vector<4x256xf32>
    %106 = arith.addf %104, %105 : vector<4x256xf32>
    %c0_63 = arith.constant 0 : index
    %c0_64 = arith.constant 0 : index
    %c0_65 = arith.constant 0 : index
    %107 = vector.load %arg1[%c0_63, %c0_64, %c0_65] : memref<1x4x256xf32, #tpu.memory_space<vmem>>, vector<1x4x256xf32>
    %108 = vector.shape_cast %107 : vector<1x4x256xf32> to vector<4x256xf32>
    %109 = arith.addf %106, %108 : vector<4x256xf32>
    %c0_66 = arith.constant 0 : index
    %c0_67 = arith.constant 0 : index
    %c0_68 = arith.constant 0 : index
    %110 = vector.load %arg8[%c0_66, %c0_67, %c0_68] : memref<1x4x256xf32, #tpu.memory_space<vmem>>, vector<1x4x256xf32>
    %111 = vector.shape_cast %110 : vector<1x4x256xf32> to vector<4x256xf32>
    %112 = vector.shape_cast %109 : vector<4x256xf32> to vector<1x4x256xf32>
    tpu.vector_store %arg8[%c0_66, %c0_67, %c0_68], %112 {strides = array<i32>} : memref<1x4x256xf32, #tpu.memory_space<vmem>>, vector<1x4x256xf32>,
    return
  }
  func.func @transform_0(%arg0: i32) -> (i32, i32, i32) {
    %c0_i32 = arith.constant 0 : i32
    %c0_i32_0 = arith.constant 0 : i32
    %c0_i32_1 = arith.constant 0 : i32
    return %arg0, %c0_i32, %c0_i32_0 : i32, i32, i32
  }
  func.func @transform_1(%arg0: i32) -> (i32, i32, i32) {
    %c0_i32 = arith.constant 0 : i32
    %c0_i32_0 = arith.constant 0 : i32
    %c0_i32_1 = arith.constant 0 : i32
    return %arg0, %c0_i32, %c0_i32_0 : i32, i32, i32
  }
  func.func @transform_2(%arg0: i32) -> (i32, i32) {
    %c0_i32 = arith.constant 0 : i32
    %c0_i32_0 = arith.constant 0 : i32
    %c0_i32_1 = arith.constant 0 : i32
    return %c0_i32, %c0_i32_0 : i32, i32
  }
  func.func @transform_3(%arg0: i32) -> (i32, i32) {
    %c0_i32 = arith.constant 0 : i32
    %c0_i32_0 = arith.constant 0 : i32
    %c0_i32_1 = arith.constant 0 : i32
    return %c0_i32, %c0_i32_0 : i32, i32
  }
  func.func @transform_4(%arg0: i32) -> (i32, i32) {
    %c0_i32 = arith.constant 0 : i32
    %c0_i32_0 = arith.constant 0 : i32
    %c0_i32_1 = arith.constant 0 : i32
    return %c0_i32, %c0_i32_0 : i32, i32
  }
  func.func @transform_5(%arg0: i32) -> (i32, i32) {
    %c0_i32 = arith.constant 0 : i32
    %c0_i32_0 = arith.constant 0 : i32
    %c0_i32_1 = arith.constant 0 : i32
    return %c0_i32, %c0_i32_0 : i32, i32
  }
  func.func @transform_6(%arg0: i32) -> (i32, i32) {
    %c0_i32 = arith.constant 0 : i32
    %c0_i32_0 = arith.constant 0 : i32
    %c0_i32_1 = arith.constant 0 : i32
    return %c0_i32, %c0_i32_0 : i32, i32
  }
  func.func @transform_7(%arg0: i32) -> (i32, i32, i32) {
    %c0_i32 = arith.constant 0 : i32
    %c0_i32_0 = arith.constant 0 : i32
    %c0_i32_1 = arith.constant 0 : i32
    return %arg0, %c0_i32, %c0_i32_0 : i32, i32, i32
  }
}

</mosaic_0001>

<llo_original>
// kernel: tpu_custom_call.1
$region0: #{tpu_custom_call.1}
  #allocation0 [shape = 'u32[]', space=smem, size = 0x4, offset = 0x4, fixed_abs, tag = 'smem constant byte address 0x4 - core index']
  #allocation1 [shape = 'u32[72,128]{1,0:T(1,128)}', space=vmem, size = 0x9000, scoped, tag = 'internal scratch']
  #allocation2 [shape = 'f32[128,1]{1,0:T(8,128)}', space=vmem, size = 0x10000, scoped, tag = 'scratch operand']
  #allocation3 [shape = 'f32[128,1]{1,0:T(8,128)}', space=vmem, size = 0x10000, scoped, tag = 'scratch operand']
  #allocation4 [shape = 'f32[128,128]{1,0:T(8,128)}', space=vmem, size = 0x10000, scoped, tag = 'scratch operand']
  #allocation5 [shape = 'f32[4,256]{1,0:T(4,128)}', space=vmem, size = 0x1000, scoped, tag = 'scratch operand']
  %s0 = inlined_call_operand.vmem [shape: f32[2,4,256], index: 0, kind: input, shape index: {}]
  %s1 = inlined_call_operand.vmem [shape: f32[2,4,256], index: 1, kind: input, shape index: {}]
  %s2 = inlined_call_operand.vmem [shape: bf16[128,4], index: 2, kind: input, shape index: {}]
  %s3 = inlined_call_operand.vmem [shape: bf16[256,4], index: 3, kind: input, shape index: {}]
  %s4 = inlined_call_operand.vmem [shape: f32[4,128], index: 4, kind: input, shape index: {}]
  %s5 = inlined_call_operand.vmem [shape: f32[128,128], index: 5, kind: input, shape index: {}]
  %s6 = inlined_call_operand.vmem [shape: f32[4,3], index: 6, kind: input, shape index: {}]
  %s7 = inlined_call_operand.hbm [shape: f32[2,4,256], index: 7, kind: output, shape index: {}]
  %s8 = sld [smem:[#allocation0]]
  $region61: #{tpu_custom_call.1} parent=0
    _
  %s10 = ssub.s32 1, %s8
  %s11 = scalar_select 0, %s10, %s8
  $region1: #{tpu_custom_call.1} parent=0
    #allocation6 [shape = 'u8[8192]{0}', space=vmem, size = 0x2000, scoped, tag = 'output window, operand 0']
    #allocation7 [shape = 's32[2]{0}', space=sflag, size = 0x8, scoped, tag = 'scoped memory for tpu_custom_call.1']
    %12 = vsyncpa [#allocation7], 0
    %s13 = scalar_lea.sflag [#allocation7], 1
    %14 = vsyncpa %s13, 0
    loop: start=0, step=1, limit=4
    $region2: #{tpu_custom_call.1} parent=1 // loop_pre_header
      _
    $region3: #{tpu_custom_call.1} parent=1 // loop_header
      %s16 = sphi 0, %s20
      %p17 = scmp.ge.s32.totalorder %s16, 4
      %s26 = sphi 0, %s28
      %s29 = sphi 0, %s26
      %s30 = sphi 0, %s29
      %s46 = sphi 0, %s30
      %s52 = sphi 0, %s54
      %s55 = sphi 0, %s52
      %s56 = sphi 0, %s55
      %s72 = sphi 0, %s56
      %s76 = sphi 0, %s76
      %s78 = sphi 0, %s76
      %s79 = sphi 0, %s78
      %s93 = sphi 0, %s79
      %s97 = sphi 0, %s97
      %s99 = sphi 0, %s97
      %s100 = sphi 0, %s99
      %s114 = sphi 0, %s100
      %s118 = sphi 0, %s118
      %s120 = sphi 0, %s118
      %s121 = sphi 0, %s120
      %s135 = sphi 0, %s121
      %s139 = sphi 0, %s139
      %s141 = sphi 0, %s139
      %s142 = sphi 0, %s141
      %s156 = sphi 0, %s142
      %s160 = sphi 0, %s160
      %s162 = sphi 0, %s160
      %s163 = sphi 0, %s162
      %s177 = sphi 0, %s163
      %s183 = sphi 0, %s185
      %s186 = sphi 0, %s183
      %s187 = sphi 0, %s186
      %s203 = sphi 0, %s187
    $region4: #{tpu_custom_call.1} parent=1 // loop_header_branch
      %19 = sbr.rel (%p17) target = $region8
    $region5: #{tpu_custom_call.1} parent=1 // loop_body
      %s21 = ssub.s32 %s16, 1
      %s22 = ssub.s32 %s16, 2
      %s23 = sadd.s32 %s16, 1
      %s24 = ssub.s32 %s16, %s23
      %p25 = scmp.eq.s32.totalorder %s24, 0
      %s27 = sadd.s32 %s26, 1
      %s28 = scalar_select %p25, %s26, %s27
      %p31 = pneg %p25
      %p32 = scmp.eq.s32.totalorder %s16, 1
      %p33 = por %p31, %p32
      %p34 = scmp.ne.s32.totalorder %s26, %s29
      %p35 = scmp.eq.s32.totalorder %s16, 0
      %p36 = por %p34, %p35
      %p37 = scmp.ne.s32.totalorder %s26, %s29
      %p38 = scmp.eq.s32.totalorder %s21, 1
      %p39 = por %p37, %p38
      %p40 = scmp.ne.s32.totalorder %s29, %s30
      %p41 = scmp.eq.s32.totalorder %s21, 0
      %p42 = por %p40, %p41
      %p43 = scmp.ne.s32.totalorder %s29, %s30
      %p44 = scmp.eq.s32.totalorder %s22, 1
      %p45 = por %p43, %p44
      %p47 = scmp.ne.s32.totalorder %s30, %s46
      %p48 = scmp.eq.s32.totalorder %s22, 0
      %p49 = por %p47, %p48
      %s50 = ssub.s32 %s16, %s23
      %p51 = scmp.eq.s32.totalorder %s50, 0
      %s53 = sadd.s32 %s52, 1
      %s54 = scalar_select %p51, %s52, %s53
      %p57 = pneg %p51
      %p58 = scmp.eq.s32.totalorder %s16, 1
      %p59 = por %p57, %p58
      %p60 = scmp.ne.s32.totalorder %s52, %s55
      %p61 = scmp.eq.s32.totalorder %s16, 0
      %p62 = por %p60, %p61
      %p63 = scmp.ne.s32.totalorder %s52, %s55
      %p64 = scmp.eq.s32.totalorder %s21, 1
      %p65 = por %p63, %p64
      %p66 = scmp.ne.s32.totalorder %s55, %s56
      %p67 = scmp.eq.s32.totalorder %s21, 0
      %p68 = por %p66, %p67
      %p69 = scmp.ne.s32.totalorder %s55, %s56
      %p70 = scmp.eq.s32.totalorder %s22, 1
      %p71 = por %p69, %p70
      %p73 = scmp.ne.s32.totalorder %s56, %s72
      %p74 = scmp.eq.s32.totalorder %s22, 0
      %p75 = por %p73, %p74
      %s77 = sadd.s32 %s76, 1
      %p80 = scmp.eq.s32.totalorder %s16, 1
      %p81 = scmp.ne.s32.totalorder %s76, %s78
      %p82 = scmp.eq.s32.totalorder %s16, 0
      %p83 = por %p81, %p82
      %p84 = scmp.ne.s32.totalorder %s76, %s78
      %p85 = scmp.eq.s32.totalorder %s21, 1
      %p86 = por %p84, %p85
      %p87 = scmp.ne.s32.totalorder %s78, %s79
      %p88 = scmp.eq.s32.totalorder %s21, 0
      %p89 = por %p87, %p88
      %p90 = scmp.ne.s32.totalorder %s78, %s79
      %p91 = scmp.eq.s32.totalorder %s22, 1
      %p92 = por %p90, %p91
      %p94 = scmp.ne.s32.totalorder %s79, %s93
      %p95 = scmp.eq.s32.totalorder %s22, 0
      %p96 = por %p94, %p95
      %s98 = sadd.s32 %s97, 1
      %p101 = scmp.eq.s32.totalorder %s16, 1
      %p102 = scmp.ne.s32.totalorder %s97, %s99
      %p103 = scmp.eq.s32.totalorder %s16, 0
      %p104 = por %p102, %p103
      %p105 = scmp.ne.s32.totalorder %s97, %s99
      %p106 = scmp.eq.s32.totalorder %s21, 1
      %p107 = por %p105, %p106
      %p108 = scmp.ne.s32.totalorder %s99, %s100
      %p109 = scmp.eq.s32.totalorder %s21, 0
      %p110 = por %p108, %p109
      %p111 = scmp.ne.s32.totalorder %s99, %s100
      %p112 = scmp.eq.s32.totalorder %s22, 1
      %p113 = por %p111, %p112
      %p115 = scmp.ne.s32.totalorder %s100, %s114
      %p116 = scmp.eq.s32.totalorder %s22, 0
      %p117 = por %p115, %p116
      %s119 = sadd.s32 %s118, 1
      %p122 = scmp.eq.s32.totalorder %s16, 1
      %p123 = scmp.ne.s32.totalorder %s118, %s120
      %p124 = scmp.eq.s32.totalorder %s16, 0
      %p125 = por %p123, %p124
      %p126 = scmp.ne.s32.totalorder %s118, %s120
      %p127 = scmp.eq.s32.totalorder %s21, 1
      %p128 = por %p126, %p127
      %p129 = scmp.ne.s32.totalorder %s120, %s121
      %p130 = scmp.eq.s32.totalorder %s21, 0
      %p131 = por %p129, %p130
      %p132 = scmp.ne.s32.totalorder %s120, %s121
      %p133 = scmp.eq.s32.totalorder %s22, 1
      %p134 = por %p132, %p133
      %p136 = scmp.ne.s32.totalorder %s121, %s135
      %p137 = scmp.eq.s32.totalorder %s22, 0
      %p138 = por %p136, %p137
      %s140 = sadd.s32 %s139, 1
      %p143 = scmp.eq.s32.totalorder %s16, 1
      %p144 = scmp.ne.s32.totalorder %s139, %s141
      %p145 = scmp.eq.s32.totalorder %s16, 0
      %p146 = por %p144, %p145
      %p147 = scmp.ne.s32.totalorder %s139, %s141
      %p148 = scmp.eq.s32.totalorder %s21, 1
      %p149 = por %p147, %p148
      %p150 = scmp.ne.s32.totalorder %s141, %s142
      %p151 = scmp.eq.s32.totalorder %s21, 0
      %p152 = por %p150, %p151
      %p153 = scmp.ne.s32.totalorder %s141, %s142
      %p154 = scmp.eq.s32.totalorder %s22, 1
      %p155 = por %p153, %p154
      %p157 = scmp.ne.s32.totalorder %s142, %s156
      %p158 = scmp.eq.s32.totalorder %s22, 0
      %p159 = por %p157, %p158
      %s161 = sadd.s32 %s160, 1
      %p164 = scmp.eq.s32.totalorder %s16, 1
      %p165 = scmp.ne.s32.totalorder %s160, %s162
      %p166 = scmp.eq.s32.totalorder %s16, 0
      %p167 = por %p165, %p166
      %p168 = scmp.ne.s32.totalorder %s160, %s162
      %p169 = scmp.eq.s32.totalorder %s21, 1
      %p170 = por %p168, %p169
      %p171 = scmp.ne.s32.totalorder %s162, %s163
      %p172 = scmp.eq.s32.totalorder %s21, 0
      %p173 = por %p171, %p172
      %p174 = scmp.ne.s32.totalorder %s162, %s163
      %p175 = scmp.eq.s32.totalorder %s22, 1
      %p176 = por %p174, %p175
      %p178 = scmp.ne.s32.totalorder %s163, %s177
      %p179 = scmp.eq.s32.totalorder %s22, 0
      %p180 = por %p178, %p179
      %s181 = ssub.s32 %s16, %s23
      %p182 = scmp.eq.s32.totalorder %s181, 0
      %s184 = sadd.s32 %s183, 1
      %s185 = scalar_select %p182, %s183, %s184
      %p188 = pneg %p182
      %p189 = scmp.eq.s32.totalorder %s16, 1
      %p190 = por %p188, %p189
      %p191 = scmp.ne.s32.totalorder %s183, %s186
      %p192 = scmp.eq.s32.totalorder %s16, 0
      %p193 = por %p191, %p192
      %p194 = scmp.ne.s32.totalorder %s183, %s186
      %p195 = scmp.eq.s32.totalorder %s21, 1
      %p196 = por %p194, %p195
      %p197 = scmp.ne.s32.totalorder %s186, %s187
      %p198 = scmp.eq.s32.totalorder %s21, 0
      %p199 = por %p197, %p198
      %p200 = scmp.ne.s32.totalorder %s186, %s187
      %p201 = scmp.eq.s32.totalorder %s22, 1
      %p202 = por %p200, %p201
      %p204 = scmp.ne.s32.totalorder %s187, %s203
      %p205 = scmp.eq.s32.totalorder %s22, 0
      %p206 = por %p204, %p205
      %p207 = scmp.le.s32.totalorder 1, %s16
      %p208 = scmp.lt.s32.totalorder %s16, 3
      %p209 = pnand %p207, %p208
      %p210 = pneg %p209
      // Predicated region
      $region9: #{tpu_custom_call.1} parent=5 // pred_check
        _
      $region10: #{tpu_custom_call.1} parent=5 // pred_check_branch
        %212 = sbr.rel (%p209) target = $region12
      $region11: #{tpu_custom_call.1} parent=5 // pred_region
        %s213 = ssub.s32 %s16, 1
        // Predicated region
        $region13: #{tpu_custom_call.1} parent=11 // pred_check
          %p214 = pneg %p89
        $region14: #{tpu_custom_call.1} parent=11 // pred_check_branch
          %216 = sbr.rel (%p214) target = $region16
        $region15: #{tpu_custom_call.1} parent=11 // pred_region
          _
        $region16: #{tpu_custom_call.1} parent=11 // pred_fallthru
          _
        // Predicated region
        $region17: #{tpu_custom_call.1} parent=11 // pred_check
          %p217 = pneg %p110
        $region18: #{tpu_custom_call.1} parent=11 // pred_check_branch
          %219 = sbr.rel (%p217) target = $region20
        $region19: #{tpu_custom_call.1} parent=11 // pred_region
          _
        $region20: #{tpu_custom_call.1} parent=11 // pred_fallthru
          _
        // Predicated region
        $region21: #{tpu_custom_call.1} parent=11 // pred_check
          %p220 = pneg %p131
        $region22: #{tpu_custom_call.1} parent=11 // pred_check_branch
          %222 = sbr.rel (%p220) target = $region24
        $region23: #{tpu_custom_call.1} parent=11 // pred_region
          _
        $region24: #{tpu_custom_call.1} parent=11 // pred_fallthru
          _
        // Predicated region
        $region25: #{tpu_custom_call.1} parent=11 // pred_check
          %p223 = pneg %p152
        $region26: #{tpu_custom_call.1} parent=11 // pred_check_branch
          %225 = sbr.rel (%p223) target = $region28
        $region27: #{tpu_custom_call.1} parent=11 // pred_region
          _
        $region28: #{tpu_custom_call.1} parent=11 // pred_fallthru
          _
        // Predicated region
        $region29: #{tpu_custom_call.1} parent=11 // pred_check
          %p226 = pneg %p173
        $region30: #{tpu_custom_call.1} parent=11 // pred_check_branch
          %228 = sbr.rel (%p226) target = $region32
        $region31: #{tpu_custom_call.1} parent=11 // pred_region
          _
        $region32: #{tpu_custom_call.1} parent=11 // pred_fallthru
          _
      $region12: #{tpu_custom_call.1} parent=5 // pred_fallthru
        _
      %p229 = scmp.lt.s32.totalorder %s16, 2
      // Predicated region
      $region33: #{tpu_custom_call.1} parent=5 // pred_check
        %p230 = pneg %p229
      $region34: #{tpu_custom_call.1} parent=5 // pred_check_branch
        %232 = sbr.rel (%p230) target = $region36
      $region35: #{tpu_custom_call.1} parent=5 // pred_region
        // Predicated region
        $region37: #{tpu_custom_call.1} parent=35 // pred_check
          %p233 = pneg %p36
        $region38: #{tpu_custom_call.1} parent=35 // pred_check_branch
          %235 = sbr.rel (%p233) target = $region40
        $region39: #{tpu_custom_call.1} parent=35 // pred_region
          %p236 = scmp.lt.s32.totalorder %s16, 1
          %s237 = scalar_select %p236, %s16, 1
          %s238 = smul.addr %s237, 2
          %s239 = smul.addr %s238, 4
          %s240 = scalar_lea.vmem %s0, %s239
        $region40: #{tpu_custom_call.1} parent=35 // pred_fallthru
          _
        // Predicated region
        $region41: #{tpu_custom_call.1} parent=35 // pred_check
          %p241 = pneg %p62
        $region42: #{tpu_custom_call.1} parent=35 // pred_check_branch
          %243 = sbr.rel (%p241) target = $region44
        $region43: #{tpu_custom_call.1} parent=35 // pred_region
          %p244 = scmp.lt.s32.totalorder %s16, 1
          %s245 = scalar_select %p244, %s16, 1
          %s246 = smul.addr %s245, 2
          %s247 = smul.addr %s246, 4
          %s248 = scalar_lea.vmem %s1, %s247
        $region44: #{tpu_custom_call.1} parent=35 // pred_fallthru
          _
      $region36: #{tpu_custom_call.1} parent=5 // pred_fallthru
        _
      %p249 = scmp.le.s32.totalorder 1, %s16
      %p250 = scmp.lt.s32.totalorder %s16, 3
      %p251 = pnand %p249, %p250
      %p252 = pneg %p251
      // Predicated region
      $region45: #{tpu_custom_call.1} parent=5 // pred_check
        _
      $region46: #{tpu_custom_call.1} parent=5 // pred_check_branch
        %254 = sbr.rel (%p251) target = $region48
      $region47: #{tpu_custom_call.1} parent=5 // pred_region
        %s255 = ssub.s32 %s16, 1
        %p256 = scmp.lt.s32.totalorder %s21, 1
        %s257 = scalar_select %p256, %s21, 1
        %s258 = smul.addr %s257, 2
        %s259 = smul.addr %s258, 4
        %s260 = scalar_lea.vmem %s0, %s259
        %p261 = pneg %p42
        %p262 = pneg %p39
        %p263 = scmp.lt.s32.totalorder %s21, 1
        %s264 = scalar_select %p263, %s21, 1
        %s265 = smul.addr %s264, 2
        %s266 = smul.addr %s265, 4
        %s267 = scalar_lea.vmem %s1, %s266
        %p268 = pneg %p68
        %p269 = pneg %p65
        %p270 = pneg %p89
        %p271 = pneg %p86
        %p272 = pneg %p110
        %p273 = pneg %p107
        %p274 = pneg %p131
        %p275 = pneg %p128
        %p276 = pneg %p152
        %p277 = pneg %p149
        %p278 = pneg %p173
        %p279 = pneg %p170
        %p280 = pneg %p199
        %p281 = pneg %p196
        %s282 = sand.u32 %s186, 1
        %s283 = scalar_lea.sflag [#allocation7], %s282
        %s284 = sand.u32 %s186, 1
        %s285 = smul.addr %s284, 8
        %s286 = scalar_lea.vmem [#allocation6], %s285
        %p287 = scmp.lt.s32.totalorder %s21, 1
        %s288 = scalar_select %p287, %s21, 1
        %s289 = smul.addr %s288, 2
        %s290 = smul.addr %s289, 4
        %s291 = scalar_lea.vmem %s0, %s290
        %p292 = scmp.lt.s32.totalorder %s21, 1
        %s293 = scalar_select %p292, %s21, 1
        %s294 = smul.addr %s293, 2
        %s295 = smul.addr %s294, 4
        %s296 = scalar_lea.vmem %s1, %s295
        %vm298 = vcmask 7168
        %299 = vst.msk [vmem:[#allocation2] sm:$0xff] %vm298, -inf
        %300 = vst.msk [vmem:[#allocation2 + $0x8] sm:$0xff] %vm298, -inf
        %301 = vst.msk [vmem:[#allocation2 + $0x10] sm:$0xff] %vm298, -inf
        %302 = vst.msk [vmem:[#allocation2 + $0x18] sm:$0xff] %vm298, -inf
        %303 = vst.msk [vmem:[#allocation2 + $0x20] sm:$0xff] %vm298, -inf
        %304 = vst.msk [vmem:[#allocation2 + $0x28] sm:$0xff] %vm298, -inf
        %305 = vst.msk [vmem:[#allocation2 + $0x30] sm:$0xff] %vm298, -inf
        %306 = vst.msk [vmem:[#allocation2 + $0x38] sm:$0xff] %vm298, -inf
        %307 = vst.msk [vmem:[#allocation2 + $0x40] sm:$0xff] %vm298, -inf
        %308 = vst.msk [vmem:[#allocation2 + $0x48] sm:$0xff] %vm298, -inf
        %309 = vst.msk [vmem:[#allocation2 + $0x50] sm:$0xff] %vm298, -inf
        %310 = vst.msk [vmem:[#allocation2 + $0x58] sm:$0xff] %vm298, -inf
        %311 = vst.msk [vmem:[#allocation2 + $0x60] sm:$0xff] %vm298, -inf
        %312 = vst.msk [vmem:[#allocation2 + $0x68] sm:$0xff] %vm298, -inf
        %313 = vst.msk [vmem:[#allocation2 + $0x70] sm:$0xff] %vm298, -inf
        %314 = vst.msk [vmem:[#allocation2 + $0x78] sm:$0xff] %vm298, -inf
        %315 = vst.msk [vmem:[#allocation3] sm:$0xff] %vm298, 0.0
        %316 = vst.msk [vmem:[#allocation3 + $0x8] sm:$0xff] %vm298, 0.0
        %317 = vst.msk [vmem:[#allocation3 + $0x10] sm:$0xff] %vm298, 0.0
        %318 = vst.msk [vmem:[#allocation3 + $0x18] sm:$0xff] %vm298, 0.0
        %319 = vst.msk [vmem:[#allocation3 + $0x20] sm:$0xff] %vm298, 0.0
        %320 = vst.msk [vmem:[#allocation3 + $0x28] sm:$0xff] %vm298, 0.0
        %321 = vst.msk [vmem:[#allocation3 + $0x30] sm:$0xff] %vm298, 0.0
        %322 = vst.msk [vmem:[#allocation3 + $0x38] sm:$0xff] %vm298, 0.0
        %323 = vst.msk [vmem:[#allocation3 + $0x40] sm:$0xff] %vm298, 0.0
        %324 = vst.msk [vmem:[#allocation3 + $0x48] sm:$0xff] %vm298, 0.0
        %325 = vst.msk [vmem:[#allocation3 + $0x50] sm:$0xff] %vm298, 0.0
        %326 = vst.msk [vmem:[#allocation3 + $0x58] sm:$0xff] %vm298, 0.0
        %327 = vst.msk [vmem:[#allocation3 + $0x60] sm:$0xff] %vm298, 0.0
        %328 = vst.msk [vmem:[#allocation3 + $0x68] sm:$0xff] %vm298, 0.0
        %329 = vst.msk [vmem:[#allocation3 + $0x70] sm:$0xff] %vm298, 0.0
        %330 = vst.msk [vmem:[#allocation3 + $0x78] sm:$0xff] %vm298, 0.0
        %331 = vst [vmem:[#allocation4] sm:$0xff] 0.0
        %332 = vst [vmem:[#allocation4 + $0x8] sm:$0xff] 0.0
        %333 = vst [vmem:[#allocation4 + $0x10] sm:$0xff] 0.0
        %334 = vst [vmem:[#allocation4 + $0x18] sm:$0xff] 0.0
        %335 = vst [vmem:[#allocation4 + $0x20] sm:$0xff] 0.0
        %336 = vst [vmem:[#allocation4 + $0x28] sm:$0xff] 0.0
        %337 = vst [vmem:[#allocation4 + $0x30] sm:$0xff] 0.0
        %338 = vst [vmem:[#allocation4 + $0x38] sm:$0xff] 0.0
        %339 = vst [vmem:[#allocation4 + $0x40] sm:$0xff] 0.0
        %340 = vst [vmem:[#allocation4 + $0x48] sm:$0xff] 0.0
        %341 = vst [vmem:[#allocation4 + $0x50] sm:$0xff] 0.0
        %342 = vst [vmem:[#allocation4 + $0x58] sm:$0xff] 0.0
        %343 = vst [vmem:[#allocation4 + $0x60] sm:$0xff] 0.0
        %344 = vst [vmem:[#allocation4 + $0x68] sm:$0xff] 0.0
        %345 = vst [vmem:[#allocation4 + $0x70] sm:$0xff] 0.0
        %346 = vst [vmem:[#allocation4 + $0x78] sm:$0xff] 0.0
        %v347 = vld [vmem:[%s296] sm:$0xff]
        %349 = vst [vmem:[#allocation1] ss:$2 sm:$0xff] %v347
        %v350 = vld.sshfl [vmem:[#allocation1] sm:$0xff pattern:$0x75316420]
        %v351 = vld.sshfl [vmem:[#allocation1 + $0x8] sm:$0xff pattern:$0x75316420]
        %v354 = vpack.c.bf16 %v350, %v350
        %v355 = vpack.c.bf16 %v351, %v351
        %v356 = vld [vmem:[%s3] sm:$0xf]
        %v357 = vld [vmem:[%s3 + $0x4] sm:$0xf]
        %v358 = vld [vmem:[%s3 + $0x8] sm:$0xf]
        %v359 = vld [vmem:[%s3 + $0xc] sm:$0xf]
        %v360 = vld [vmem:[%s3 + $0x10] sm:$0xf]
        %v361 = vld [vmem:[%s3 + $0x14] sm:$0xf]
        %v362 = vld [vmem:[%s3 + $0x18] sm:$0xf]
        %v363 = vld [vmem:[%s3 + $0x1c] sm:$0xf]
        %v364 = vld [vmem:[%s3 + $0x20] sm:$0xf]
        %v365 = vld [vmem:[%s3 + $0x24] sm:$0xf]
        %v366 = vld [vmem:[%s3 + $0x28] sm:$0xf]
        %v367 = vld [vmem:[%s3 + $0x2c] sm:$0xf]
        %v368 = vld [vmem:[%s3 + $0x30] sm:$0xf]
        %v369 = vld [vmem:[%s3 + $0x34] sm:$0xf]
        %v370 = vld [vmem:[%s3 + $0x38] sm:$0xf]
        %v371 = vld [vmem:[%s3 + $0x3c] sm:$0xf]
        %v372 = vld [vmem:[%s3 + $0x40] sm:$0xf]
        %v373 = vld [vmem:[%s3 + $0x44] sm:$0xf]
        %v374 = vld [vmem:[%s3 + $0x48] sm:$0xf]
        %v375 = vld [vmem:[%s3 + $0x4c] sm:$0xf]
        %v376 = vld [vmem:[%s3 + $0x50] sm:$0xf]
        %v377 = vld [vmem:[%s3 + $0x54] sm:$0xf]
        %v378 = vld [vmem:[%s3 + $0x58] sm:$0xf]
        %v379 = vld [vmem:[%s3 + $0x5c] sm:$0xf]
        %v380 = vld [vmem:[%s3 + $0x60] sm:$0xf]
        %v381 = vld [vmem:[%s3 + $0x64] sm:$0xf]
        %v382 = vld [vmem:[%s3 + $0x68] sm:$0xf]
        %v383 = vld [vmem:[%s3 + $0x6c] sm:$0xf]
        %v384 = vld [vmem:[%s3 + $0x70] sm:$0xf]
        %v385 = vld [vmem:[%s3 + $0x74] sm:$0xf]
        %v386 = vld [vmem:[%s3 + $0x78] sm:$0xf]
        %v387 = vld [vmem:[%s3 + $0x7c] sm:$0xf]
        %v420 = vunpack.c.l.b16 %v356
        %v421 = vunpack.c.l.b16 %v357
        %v422 = vunpack.c.l.b16 %v358
        %v423 = vunpack.c.l.b16 %v359
        %v424 = vunpack.c.l.b16 %v360
        %v425 = vunpack.c.l.b16 %v361
        %v426 = vunpack.c.l.b16 %v362
        %v427 = vunpack.c.l.b16 %v363
        %v428 = vunpack.c.l.b16 %v364
        %v429 = vunpack.c.l.b16 %v365
        %v430 = vunpack.c.l.b16 %v366
        %v431 = vunpack.c.l.b16 %v367
        %v432 = vunpack.c.l.b16 %v368
        %v433 = vunpack.c.l.b16 %v369
        %v434 = vunpack.c.l.b16 %v370
        %v435 = vunpack.c.l.b16 %v371
        %v436 = vunpack.c.l.b16 %v372
        %v437 = vunpack.c.l.b16 %v373
        %v438 = vunpack.c.l.b16 %v374
        %v439 = vunpack.c.l.b16 %v375
        %v440 = vunpack.c.l.b16 %v376
        %v441 = vunpack.c.l.b16 %v377
        %v442 = vunpack.c.l.b16 %v378
        %v443 = vunpack.c.l.b16 %v379
        %v444 = vunpack.c.l.b16 %v380
        %v445 = vunpack.c.l.b16 %v381
        %v446 = vunpack.c.l.b16 %v382
        %v447 = vunpack.c.l.b16 %v383
        %v448 = vunpack.c.l.b16 %v384
        %v449 = vunpack.c.l.b16 %v385
        %v450 = vunpack.c.l.b16 %v386
        %v451 = vunpack.c.l.b16 %v387
        %v452 = vpack.c.b16 %v421, %v420
        %v453 = vpack.c.b16 %v423, %v422
        %v454 = vpack.c.b16 %v425, %v424
        %v455 = vpack.c.b16 %v427, %v426
        %v456 = vpack.c.b16 %v429, %v428
        %v457 = vpack.c.b16 %v431, %v430
        %v458 = vpack.c.b16 %v433, %v432
        %v459 = vpack.c.b16 %v435, %v434
        %v460 = vpack.c.b16 %v437, %v436
        %v461 = vpack.c.b16 %v439, %v438
        %v462 = vpack.c.b16 %v441, %v440
        %v463 = vpack.c.b16 %v443, %v442
        %v464 = vpack.c.b16 %v445, %v444
        %v465 = vpack.c.b16 %v447, %v446
        %v466 = vpack.c.b16 %v449, %v448
        %v467 = vpack.c.b16 %v451, %v450
        %vm468 = vcmask 31744
        %v470 = vsel %vm468, %v452, 0
        %v473 = vsel %vm468, %v453, 0
        %v476 = vsel %vm468, %v454, 0
        %v479 = vsel %vm468, %v455, 0
        %v482 = vsel %vm468, %v456, 0
        %v485 = vsel %vm468, %v457, 0
        %v488 = vsel %vm468, %v458, 0
        %v491 = vsel %vm468, %v459, 0
        %v494 = vsel %vm468, %v460, 0
        %v497 = vsel %vm468, %v461, 0
        %v500 = vsel %vm468, %v462, 0
        %v503 = vsel %vm468, %v463, 0
        %v506 = vsel %vm468, %v464, 0
        %v509 = vsel %vm468, %v465, 0
        %v512 = vsel %vm468, %v466, 0
        %v515 = vsel %vm468, %v467, 0
        %vm517 = vcmask 1041408
        %v519 = vsel %vm517, %v354, 0
        %v522 = vsel %vm517, %v355, 0
        %524 = vmatpush.bf16.msra.mxu0 0
        %525 = vmatpush.bf16.msra.mxu0 0
        %526 = vmatpush.bf16.msra.mxu0 0
        %527 = vmatpush.bf16.msra.mxu0 0
        %528 = vmatpush.bf16.msra.mxu0 0
        %529 = vmatpush.bf16.msra.mxu0 0
        %530 = vmatpush.bf16.msra.mxu0 0
        %531 = vmatpush.bf16.msra.mxu0 %v519
        %532 = vmatmul.bf16.gmra.mxu0 %v470
        %v533 = vpop.f32.mrf.mxu0
        %v534 = vadd.f32 0.0, %v533
        %v535 = vpop.f32.mrf.mxu0
        %v536 = vadd.f32 0.0, %v535
        %537 = vmatmul.bf16.gmra.mxu0 %v473
        %v538 = vpop.f32.mrf.mxu0
        %v539 = vadd.f32 0.0, %v538
        %v540 = vpop.f32.mrf.mxu0
        %v541 = vadd.f32 0.0, %v540
        %542 = vmatmul.bf16.gmra.mxu0 %v476
        %v543 = vpop.f32.mrf.mxu0
        %v544 = vadd.f32 0.0, %v543
        %v545 = vpop.f32.mrf.mxu0
        %v546 = vadd.f32 0.0, %v545
        %547 = vmatmul.bf16.gmra.mxu0 %v479
        %v548 = vpop.f32.mrf.mxu0
        %v549 = vadd.f32 0.0, %v548
        %v550 = vpop.f32.mrf.mxu0
        %v551 = vadd.f32 0.0, %v550
        %552 = vmatmul.bf16.gmra.mxu0 %v482
        %v553 = vpop.f32.mrf.mxu0
        %v554 = vadd.f32 0.0, %v553
        %v555 = vpop.f32.mrf.mxu0
        %v556 = vadd.f32 0.0, %v555
        %557 = vmatmul.bf16.gmra.mxu0 %v485
        %v558 = vpop.f32.mrf.mxu0
        %v559 = vadd.f32 0.0, %v558
        %v560 = vpop.f32.mrf.mxu0
        %v561 = vadd.f32 0.0, %v560
        %562 = vmatmul.bf16.gmra.mxu0 %v488
        %v563 = vpop.f32.mrf.mxu0
        %v564 = vadd.f32 0.0, %v563
        %v565 = vpop.f32.mrf.mxu0
        %v566 = vadd.f32 0.0, %v565
        %567 = vmatmul.bf16.gmra.mxu0 %v491
        %v568 = vpop.f32.mrf.mxu0
        %v569 = vadd.f32 0.0, %v568
        %v570 = vpop.f32.mrf.mxu0
        %v571 = vadd.f32 0.0, %v570
        %572 = vmatmul.bf16.gmra.mxu0 %v494
        %v573 = vpop.f32.mrf.mxu0
        %v574 = vadd.f32 0.0, %v573
        %v575 = vpop.f32.mrf.mxu0
        %v576 = vadd.f32 0.0, %v575
        %577 = vmatmul.bf16.gmra.mxu0 %v497
        %v578 = vpop.f32.mrf.mxu0
        %v579 = vadd.f32 0.0, %v578
        %v580 = vpop.f32.mrf.mxu0
        %v581 = vadd.f32 0.0, %v580
        %582 = vmatmul.bf16.gmra.mxu0 %v500
        %v583 = vpop.f32.mrf.mxu0
        %v584 = vadd.f32 0.0, %v583
        %v585 = vpop.f32.mrf.mxu0
        %v586 = vadd.f32 0.0, %v585
        %587 = vmatmul.bf16.gmra.mxu0 %v503
        %v588 = vpop.f32.mrf.mxu0
        %v589 = vadd.f32 0.0, %v588
        %v590 = vpop.f32.mrf.mxu0
        %v591 = vadd.f32 0.0, %v590
        %592 = vmatmul.bf16.gmra.mxu0 %v506
        %v593 = vpop.f32.mrf.mxu0
        %v594 = vadd.f32 0.0, %v593
        %v595 = vpop.f32.mrf.mxu0
        %v596 = vadd.f32 0.0, %v595
        %597 = vmatmul.bf16.gmra.mxu0 %v509
        %v598 = vpop.f32.mrf.mxu0
        %v599 = vadd.f32 0.0, %v598
        %v600 = vpop.f32.mrf.mxu0
        %v601 = vadd.f32 0.0, %v600
        %602 = vmatmul.bf16.gmra.mxu0 %v512
        %v603 = vpop.f32.mrf.mxu0
        %v604 = vadd.f32 0.0, %v603
        %v605 = vpop.f32.mrf.mxu0
        %v606 = vadd.f32 0.0, %v605
        %607 = vmatmul.bf16.gmra.mxu0 %v515
        %v608 = vpop.f32.mrf.mxu0
        %v609 = vadd.f32 0.0, %v608
        %v610 = vpop.f32.mrf.mxu0
        %v611 = vadd.f32 0.0, %v610
        %612 = vdwg.mxu0
        %613 = vmatpush.bf16.msra.mxu0 0
        %614 = vmatpush.bf16.msra.mxu0 0
        %615 = vmatpush.bf16.msra.mxu0 0
        %616 = vmatpush.bf16.msra.mxu0 0
        %617 = vmatpush.bf16.msra.mxu0 0
        %618 = vmatpush.bf16.msra.mxu0 0
        %619 = vmatpush.bf16.msra.mxu0 0
        %620 = vmatpush.bf16.msra.mxu0 %v522
        %621 = vmatmul.bf16.gmra.mxu0 %v470
        %v622 = vpop.f32.mrf.mxu0
        %v623 = vadd.f32 0.0, %v622
        %v624 = vpop.f32.mrf.mxu0
        %v625 = vadd.f32 0.0, %v624
        %626 = vmatmul.bf16.gmra.mxu0 %v473
        %v627 = vpop.f32.mrf.mxu0
        %v628 = vadd.f32 0.0, %v627
        %v629 = vpop.f32.mrf.mxu0
        %v630 = vadd.f32 0.0, %v629
        %631 = vmatmul.bf16.gmra.mxu0 %v476
        %v632 = vpop.f32.mrf.mxu0
        %v633 = vadd.f32 0.0, %v632
        %v634 = vpop.f32.mrf.mxu0
        %v635 = vadd.f32 0.0, %v634
        %636 = vmatmul.bf16.gmra.mxu0 %v479
        %v637 = vpop.f32.mrf.mxu0
        %v638 = vadd.f32 0.0, %v637
        %v639 = vpop.f32.mrf.mxu0
        %v640 = vadd.f32 0.0, %v639
        %641 = vmatmul.bf16.gmra.mxu0 %v482
        %v642 = vpop.f32.mrf.mxu0
        %v643 = vadd.f32 0.0, %v642
        %v644 = vpop.f32.mrf.mxu0
        %v645 = vadd.f32 0.0, %v644
        %646 = vmatmul.bf16.gmra.mxu0 %v485
        %v647 = vpop.f32.mrf.mxu0
        %v648 = vadd.f32 0.0, %v647
        %v649 = vpop.f32.mrf.mxu0
        %v650 = vadd.f32 0.0, %v649
        %651 = vmatmul.bf16.gmra.mxu0 %v488
        %v652 = vpop.f32.mrf.mxu0
        %v653 = vadd.f32 0.0, %v652
        %v654 = vpop.f32.mrf.mxu0
        %v655 = vadd.f32 0.0, %v654
        %656 = vmatmul.bf16.gmra.mxu0 %v491
        %v657 = vpop.f32.mrf.mxu0
        %v658 = vadd.f32 0.0, %v657
        %v659 = vpop.f32.mrf.mxu0
        %v660 = vadd.f32 0.0, %v659
        %661 = vmatmul.bf16.gmra.mxu0 %v494
        %v662 = vpop.f32.mrf.mxu0
        %v663 = vadd.f32 0.0, %v662
        %v664 = vpop.f32.mrf.mxu0
        %v665 = vadd.f32 0.0, %v664
        %666 = vmatmul.bf16.gmra.mxu0 %v497
        %v667 = vpop.f32.mrf.mxu0
        %v668 = vadd.f32 0.0, %v667
        %v669 = vpop.f32.mrf.mxu0
        %v670 = vadd.f32 0.0, %v669
        %671 = vmatmul.bf16.gmra.mxu0 %v500
        %v672 = vpop.f32.mrf.mxu0
        %v673 = vadd.f32 0.0, %v672
        %v674 = vpop.f32.mrf.mxu0
        %v675 = vadd.f32 0.0, %v674
        %676 = vmatmul.bf16.gmra.mxu0 %v503
        %v677 = vpop.f32.mrf.mxu0
        %v678 = vadd.f32 0.0, %v677
        %v679 = vpop.f32.mrf.mxu0
        %v680 = vadd.f32 0.0, %v679
        %681 = vmatmul.bf16.gmra.mxu0 %v506
        %v682 = vpop.f32.mrf.mxu0
        %v683 = vadd.f32 0.0, %v682
        %v684 = vpop.f32.mrf.mxu0
        %v685 = vadd.f32 0.0, %v684
        %686 = vmatmul.bf16.gmra.mxu0 %v509
        %v687 = vpop.f32.mrf.mxu0
        %v688 = vadd.f32 0.0, %v687
        %v689 = vpop.f32.mrf.mxu0
        %v690 = vadd.f32 0.0, %v689
        %691 = vmatmul.bf16.gmra.mxu0 %v512
        %v692 = vpop.f32.mrf.mxu0
        %v693 = vadd.f32 0.0, %v692
        %v694 = vpop.f32.mrf.mxu0
        %v695 = vadd.f32 0.0, %v694
        %696 = vmatmul.bf16.gmra.mxu0 %v515
        %v697 = vpop.f32.mrf.mxu0
        %v698 = vadd.f32 0.0, %v697
        %v699 = vpop.f32.mrf.mxu0
        %v700 = vadd.f32 0.0, %v699
        %701 = vdwg.mxu0
        %v702 = vld [vmem:[#allocation2] sm:$0xff]
        %v703 = vld [vmem:[#allocation2 + $0x8] sm:$0xff]
        %v704 = vld [vmem:[#allocation2 + $0x10] sm:$0xff]
        %v705 = vld [vmem:[#allocation2 + $0x18] sm:$0xff]
        %v706 = vld [vmem:[#allocation2 + $0x20] sm:$0xff]
        %v707 = vld [vmem:[#allocation2 + $0x28] sm:$0xff]
        %v708 = vld [vmem:[#allocation2 + $0x30] sm:$0xff]
        %v709 = vld [vmem:[#allocation2 + $0x38] sm:$0xff]
        %v710 = vld [vmem:[#allocation2 + $0x40] sm:$0xff]
        %v711 = vld [vmem:[#allocation2 + $0x48] sm:$0xff]
        %v712 = vld [vmem:[#allocation2 + $0x50] sm:$0xff]
        %v713 = vld [vmem:[#allocation2 + $0x58] sm:$0xff]
        %v714 = vld [vmem:[#allocation2 + $0x60] sm:$0xff]
        %v715 = vld [vmem:[#allocation2 + $0x68] sm:$0xff]
        %v716 = vld [vmem:[#allocation2 + $0x70] sm:$0xff]
        %v717 = vld [vmem:[#allocation2 + $0x78] sm:$0xff]
        %v718 = vmax.f32 %v534, %v623
        %719 = vmax.xlane.f32.xlu0 %v718
        %v720 = vpop.xlane.xlu0 %719
        %v721 = vmax.f32 %v536, %v625
        %722 = vmax.xlane.f32.xlu0 %v721
        %v723 = vpop.xlane.xlu0 %722
        %v724 = vmax.f32 %v539, %v628
        %725 = vmax.xlane.f32.xlu0 %v724
        %v726 = vpop.xlane.xlu0 %725
        %v727 = vmax.f32 %v541, %v630
        %728 = vmax.xlane.f32.xlu0 %v727
        %v729 = vpop.xlane.xlu0 %728
        %v730 = vmax.f32 %v544, %v633
        %731 = vmax.xlane.f32.xlu0 %v730
        %v732 = vpop.xlane.xlu0 %731
        %v733 = vmax.f32 %v546, %v635
        %734 = vmax.xlane.f32.xlu0 %v733
        %v735 = vpop.xlane.xlu0 %734
        %v736 = vmax.f32 %v549, %v638
        %737 = vmax.xlane.f32.xlu0 %v736
        %v738 = vpop.xlane.xlu0 %737
        %v739 = vmax.f32 %v551, %v640
        %740 = vmax.xlane.f32.xlu0 %v739
        %v741 = vpop.xlane.xlu0 %740
        %v742 = vmax.f32 %v554, %v643
        %743 = vmax.xlane.f32.xlu0 %v742
        %v744 = vpop.xlane.xlu0 %743
        %v745 = vmax.f32 %v556, %v645
        %746 = vmax.xlane.f32.xlu0 %v745
        %v747 = vpop.xlane.xlu0 %746
        %v748 = vmax.f32 %v559, %v648
        %749 = vmax.xlane.f32.xlu0 %v748
        %v750 = vpop.xlane.xlu0 %749
        %v751 = vmax.f32 %v561, %v650
        %752 = vmax.xlane.f32.xlu0 %v751
        %v753 = vpop.xlane.xlu0 %752
        %v754 = vmax.f32 %v564, %v653
        %755 = vmax.xlane.f32.xlu0 %v754
        %v756 = vpop.xlane.xlu0 %755
        %v757 = vmax.f32 %v566, %v655
        %758 = vmax.xlane.f32.xlu0 %v757
        %v759 = vpop.xlane.xlu0 %758
        %v760 = vmax.f32 %v569, %v658
        %761 = vmax.xlane.f32.xlu0 %v760
        %v762 = vpop.xlane.xlu0 %761
        %v763 = vmax.f32 %v571, %v660
        %764 = vmax.xlane.f32.xlu0 %v763
        %v765 = vpop.xlane.xlu0 %764
        %v766 = vmax.f32 %v702, %v720
        %v767 = vmax.f32 %v703, %v723
        %v768 = vmax.f32 %v704, %v726
        %v769 = vmax.f32 %v705, %v729
        %v770 = vmax.f32 %v706, %v732
        %v771 = vmax.f32 %v707, %v735
        %v772 = vmax.f32 %v708, %v738
        %v773 = vmax.f32 %v709, %v741
        %v774 = vmax.f32 %v710, %v744
        %v775 = vmax.f32 %v711, %v747
        %v776 = vmax.f32 %v712, %v750
        %v777 = vmax.f32 %v713, %v753
        %v778 = vmax.f32 %v714, %v756
        %v779 = vmax.f32 %v715, %v759
        %v780 = vmax.f32 %v716, %v762
        %v781 = vmax.f32 %v717, %v765
        %v782 = vsub.f32 %v702, %v766
        %v783 = vsub.f32 %v703, %v767
        %v784 = vsub.f32 %v704, %v768
        %v785 = vsub.f32 %v705, %v769
        %v786 = vsub.f32 %v706, %v770
        %v787 = vsub.f32 %v707, %v771
        %v788 = vsub.f32 %v708, %v772
        %v789 = vsub.f32 %v709, %v773
        %v790 = vsub.f32 %v710, %v774
        %v791 = vsub.f32 %v711, %v775
        %v792 = vsub.f32 %v712, %v776
        %v793 = vsub.f32 %v713, %v777
        %v794 = vsub.f32 %v714, %v778
        %v795 = vsub.f32 %v715, %v779
        %v796 = vsub.f32 %v716, %v780
        %v797 = vsub.f32 %v717, %v781
        %v798 = vmul.f32 %v782, 1.442695
        %v799 = vpow.pop %v798
        %v800 = vmul.f32 %v783, 1.442695
        %v801 = vpow.pop %v800
        %v802 = vmul.f32 %v784, 1.442695
        %v803 = vpow.pop %v802
        %v804 = vmul.f32 %v785, 1.442695
        %v805 = vpow.pop %v804
        %v806 = vmul.f32 %v786, 1.442695
        %v807 = vpow.pop %v806
        %v808 = vmul.f32 %v787, 1.442695
        %v809 = vpow.pop %v808
        %v810 = vmul.f32 %v788, 1.442695
        %v811 = vpow.pop %v810
        %v812 = vmul.f32 %v789, 1.442695
        %v813 = vpow.pop %v812
        %v814 = vmul.f32 %v790, 1.442695
        %v815 = vpow.pop %v814
        %v816 = vmul.f32 %v791, 1.442695
        %v817 = vpow.pop %v816
        %v818 = vmul.f32 %v792, 1.442695
        %v819 = vpow.pop %v818
        %v820 = vmul.f32 %v793, 1.442695
        %v821 = vpow.pop %v820
        %v822 = vmul.f32 %v794, 1.442695
        %v823 = vpow.pop %v822
        %v824 = vmul.f32 %v795, 1.442695
        %v825 = vpow.pop %v824
        %v826 = vmul.f32 %v796, 1.442695
        %v827 = vpow.pop %v826
        %v828 = vmul.f32 %v797, 1.442695
        %v829 = vpow.pop %v828
        %831 = vset.pattern.permute.xlu0 0
        %832 = vperm.xlu0 %831, %v766
        %v833 = vpop.permute.xlu0 %832
        %836 = vset.pattern.permute.xlu0 0
        %837 = vperm.xlu0 %836, %v767
        %v838 = vpop.permute.xlu0 %837
        %841 = vset.pattern.permute.xlu0 0
        %842 = vperm.xlu0 %841, %v768
        %v843 = vpop.permute.xlu0 %842
        %846 = vset.pattern.permute.xlu0 0
        %847 = vperm.xlu0 %846, %v769
        %v848 = vpop.permute.xlu0 %847
        %851 = vset.pattern.permute.xlu0 0
        %852 = vperm.xlu0 %851, %v770
        %v853 = vpop.permute.xlu0 %852
        %856 = vset.pattern.permute.xlu0 0
        %857 = vperm.xlu0 %856, %v771
        %v858 = vpop.permute.xlu0 %857
        %861 = vset.pattern.permute.xlu0 0
        %862 = vperm.xlu0 %861, %v772
        %v863 = vpop.permute.xlu0 %862
        %866 = vset.pattern.permute.xlu0 0
        %867 = vperm.xlu0 %866, %v773
        %v868 = vpop.permute.xlu0 %867
        %871 = vset.pattern.permute.xlu0 0
        %872 = vperm.xlu0 %871, %v774
        %v873 = vpop.permute.xlu0 %872
        %876 = vset.pattern.permute.xlu0 0
        %877 = vperm.xlu0 %876, %v775
        %v878 = vpop.permute.xlu0 %877
        %881 = vset.pattern.permute.xlu0 0
        %882 = vperm.xlu0 %881, %v776
        %v883 = vpop.permute.xlu0 %882
        %886 = vset.pattern.permute.xlu0 0
        %887 = vperm.xlu0 %886, %v777
        %v888 = vpop.permute.xlu0 %887
        %891 = vset.pattern.permute.xlu0 0
        %892 = vperm.xlu0 %891, %v778
        %v893 = vpop.permute.xlu0 %892
        %896 = vset.pattern.permute.xlu0 0
        %897 = vperm.xlu0 %896, %v779
        %v898 = vpop.permute.xlu0 %897
        %901 = vset.pattern.permute.xlu0 0
        %902 = vperm.xlu0 %901, %v780
        %v903 = vpop.permute.xlu0 %902
        %906 = vset.pattern.permute.xlu0 0
        %907 = vperm.xlu0 %906, %v781
        %v908 = vpop.permute.xlu0 %907
        %v910 = vsub.f32 %v534, %v833
        %v911 = vsub.f32 %v623, %v833
        %v912 = vsub.f32 %v536, %v838
        %v913 = vsub.f32 %v625, %v838
        %v914 = vsub.f32 %v539, %v843
        %v915 = vsub.f32 %v628, %v843
        %v916 = vsub.f32 %v541, %v848
        %v917 = vsub.f32 %v630, %v848
        %v918 = vsub.f32 %v544, %v853
        %v919 = vsub.f32 %v633, %v853
        %v920 = vsub.f32 %v546, %v858
        %v921 = vsub.f32 %v635, %v858
        %v922 = vsub.f32 %v549, %v863
        %v923 = vsub.f32 %v638, %v863
        %v924 = vsub.f32 %v551, %v868
        %v925 = vsub.f32 %v640, %v868
        %v926 = vsub.f32 %v554, %v873
        %v927 = vsub.f32 %v643, %v873
        %v928 = vsub.f32 %v556, %v878
        %v929 = vsub.f32 %v645, %v878
        %v930 = vsub.f32 %v559, %v883
        %v931 = vsub.f32 %v648, %v883
        %v932 = vsub.f32 %v561, %v888
        %v933 = vsub.f32 %v650, %v888
        %v934 = vsub.f32 %v564, %v893
        %v935 = vsub.f32 %v653, %v893
        %v936 = vsub.f32 %v566, %v898
        %v937 = vsub.f32 %v655, %v898
        %v938 = vsub.f32 %v569, %v903
        %v939 = vsub.f32 %v658, %v903
        %v940 = vsub.f32 %v571, %v908
        %v941 = vsub.f32 %v660, %v908
        %v942 = vmul.f32 %v910, 1.442695
        %v943 = vpow.pop %v942
        %v944 = vmul.f32 %v911, 1.442695
        %v945 = vpow.pop %v944
        %v946 = vmul.f32 %v912, 1.442695
        %v947 = vpow.pop %v946
        %v948 = vmul.f32 %v913, 1.442695
        %v949 = vpow.pop %v948
        %v950 = vmul.f32 %v914, 1.442695
        %v951 = vpow.pop %v950
        %v952 = vmul.f32 %v915, 1.442695
        %v953 = vpow.pop %v952
        %v954 = vmul.f32 %v916, 1.442695
        %v955 = vpow.pop %v954
        %v956 = vmul.f32 %v917, 1.442695
        %v957 = vpow.pop %v956
        %v958 = vmul.f32 %v918, 1.442695
        %v959 = vpow.pop %v958
        %v960 = vmul.f32 %v919, 1.442695
        %v961 = vpow.pop %v960
        %v962 = vmul.f32 %v920, 1.442695
        %v963 = vpow.pop %v962
        %v964 = vmul.f32 %v921, 1.442695
        %v965 = vpow.pop %v964
        %v966 = vmul.f32 %v922, 1.442695
        %v967 = vpow.pop %v966
        %v968 = vmul.f32 %v923, 1.442695
        %v969 = vpow.pop %v968
        %v970 = vmul.f32 %v924, 1.442695
        %v971 = vpow.pop %v970
        %v972 = vmul.f32 %v925, 1.442695
        %v973 = vpow.pop %v972
        %v974 = vmul.f32 %v926, 1.442695
        %v975 = vpow.pop %v974
        %v976 = vmul.f32 %v927, 1.442695
        %v977 = vpow.pop %v976
        %v978 = vmul.f32 %v928, 1.442695
        %v979 = vpow.pop %v978
        %v980 = vmul.f32 %v929, 1.442695
        %v981 = vpow.pop %v980
        %v982 = vmul.f32 %v930, 1.442695
        %v983 = vpow.pop %v982
        %v984 = vmul.f32 %v931, 1.442695
        %v985 = vpow.pop %v984
        %v986 = vmul.f32 %v932, 1.442695
        %v987 = vpow.pop %v986
        %v988 = vmul.f32 %v933, 1.442695
        %v989 = vpow.pop %v988
        %v990 = vmul.f32 %v934, 1.442695
        %v991 = vpow.pop %v990
        %v992 = vmul.f32 %v935, 1.442695
        %v993 = vpow.pop %v992
        %v994 = vmul.f32 %v936, 1.442695
        %v995 = vpow.pop %v994
        %v996 = vmul.f32 %v937, 1.442695
        %v997 = vpow.pop %v996
        %v998 = vmul.f32 %v938, 1.442695
        %v999 = vpow.pop %v998
        %v1000 = vmul.f32 %v939, 1.442695
        %v1001 = vpow.pop %v1000
        %v1002 = vmul.f32 %v940, 1.442695
        %v1003 = vpow.pop %v1002
        %v1004 = vmul.f32 %v941, 1.442695
        %v1005 = vpow.pop %v1004
        %v1006 = vld [vmem:[#allocation3] sm:$0xff]
        %v1007 = vld [vmem:[#allocation3 + $0x8] sm:$0xff]
        %v1008 = vld [vmem:[#allocation3 + $0x10] sm:$0xff]
        %v1009 = vld [vmem:[#allocation3 + $0x18] sm:$0xff]
        %v1010 = vld [vmem:[#allocation3 + $0x20] sm:$0xff]
        %v1011 = vld [vmem:[#allocation3 + $0x28] sm:$0xff]
        %v1012 = vld [vmem:[#allocation3 + $0x30] sm:$0xff]
        %v1013 = vld [vmem:[#allocation3 + $0x38] sm:$0xff]
        %v1014 = vld [vmem:[#allocation3 + $0x40] sm:$0xff]
        %v1015 = vld [vmem:[#allocation3 + $0x48] sm:$0xff]
        %v1016 = vld [vmem:[#allocation3 + $0x50] sm:$0xff]
        %v1017 = vld [vmem:[#allocation3 + $0x58] sm:$0xff]
        %v1018 = vld [vmem:[#allocation3 + $0x60] sm:$0xff]
        %v1019 = vld [vmem:[#allocation3 + $0x68] sm:$0xff]
        %v1020 = vld [vmem:[#allocation3 + $0x70] sm:$0xff]
        %v1021 = vld [vmem:[#allocation3 + $0x78] sm:$0xff]
        %v1022 = vmul.f32 %v799, %v1006
        %v1023 = vmul.f32 %v801, %v1007
        %v1024 = vmul.f32 %v803, %v1008
        %v1025 = vmul.f32 %v805, %v1009
        %v1026 = vmul.f32 %v807, %v1010
        %v1027 = vmul.f32 %v809, %v1011
        %v1028 = vmul.f32 %v811, %v1012
        %v1029 = vmul.f32 %v813, %v1013
        %v1030 = vmul.f32 %v815, %v1014
        %v1031 = vmul.f32 %v817, %v1015
        %v1032 = vmul.f32 %v819, %v1016
        %v1033 = vmul.f32 %v821, %v1017
        %v1034 = vmul.f32 %v823, %v1018
        %v1035 = vmul.f32 %v825, %v1019
        %v1036 = vmul.f32 %v827, %v1020
        %v1037 = vmul.f32 %v829, %v1021
        %v1038 = vadd.f32 %v943, %v945
        %1039 = vadd.xlane.f32.xlu0 %v1038
        %v1040 = vpop.xlane.xlu0 %1039
        %v1041 = vadd.f32 %v947, %v949
        %1042 = vadd.xlane.f32.xlu0 %v1041
        %v1043 = vpop.xlane.xlu0 %1042
        %v1044 = vadd.f32 %v951, %v953
        %1045 = vadd.xlane.f32.xlu0 %v1044
        %v1046 = vpop.xlane.xlu0 %1045
        %v1047 = vadd.f32 %v955, %v957
        %1048 = vadd.xlane.f32.xlu0 %v1047
        %v1049 = vpop.xlane.xlu0 %1048
        %v1050 = vadd.f32 %v959, %v961
        %1051 = vadd.xlane.f32.xlu0 %v1050
        %v1052 = vpop.xlane.xlu0 %1051
        %v1053 = vadd.f32 %v963, %v965
        %1054 = vadd.xlane.f32.xlu0 %v1053
        %v1055 = vpop.xlane.xlu0 %1054
        %v1056 = vadd.f32 %v967, %v969
        %1057 = vadd.xlane.f32.xlu0 %v1056
        %v1058 = vpop.xlane.xlu0 %1057
        %v1059 = vadd.f32 %v971, %v973
        %1060 = vadd.xlane.f32.xlu0 %v1059
        %v1061 = vpop.xlane.xlu0 %1060
        %v1062 = vadd.f32 %v975, %v977
        %1063 = vadd.xlane.f32.xlu0 %v1062
        %v1064 = vpop.xlane.xlu0 %1063
        %v1065 = vadd.f32 %v979, %v981
        %1066 = vadd.xlane.f32.xlu0 %v1065
        %v1067 = vpop.xlane.xlu0 %1066
        %v1068 = vadd.f32 %v983, %v985
        %1069 = vadd.xlane.f32.xlu0 %v1068
        %v1070 = vpop.xlane.xlu0 %1069
        %v1071 = vadd.f32 %v987, %v989
        %1072 = vadd.xlane.f32.xlu0 %v1071
        %v1073 = vpop.xlane.xlu0 %1072
        %v1074 = vadd.f32 %v991, %v993
        %1075 = vadd.xlane.f32.xlu0 %v1074
        %v1076 = vpop.xlane.xlu0 %1075
        %v1077 = vadd.f32 %v995, %v997
        %1078 = vadd.xlane.f32.xlu0 %v1077
        %v1079 = vpop.xlane.xlu0 %1078
        %v1080 = vadd.f32 %v999, %v1001
        %1081 = vadd.xlane.f32.xlu0 %v1080
        %v1082 = vpop.xlane.xlu0 %1081
        %v1083 = vadd.f32 %v1003, %v1005
        %1084 = vadd.xlane.f32.xlu0 %v1083
        %v1085 = vpop.xlane.xlu0 %1084
        %v1086 = vadd.f32 %v1022, %v1040
        %v1087 = vadd.f32 %v1023, %v1043
        %v1088 = vadd.f32 %v1024, %v1046
        %v1089 = vadd.f32 %v1025, %v1049
        %v1090 = vadd.f32 %v1026, %v1052
        %v1091 = vadd.f32 %v1027, %v1055
        %v1092 = vadd.f32 %v1028, %v1058
        %v1093 = vadd.f32 %v1029, %v1061
        %v1094 = vadd.f32 %v1030, %v1064
        %v1095 = vadd.f32 %v1031, %v1067
        %v1096 = vadd.f32 %v1032, %v1070
        %v1097 = vadd.f32 %v1033, %v1073
        %v1098 = vadd.f32 %v1034, %v1076
        %v1099 = vadd.f32 %v1035, %v1079
        %v1100 = vadd.f32 %v1036, %v1082
        %v1101 = vadd.f32 %v1037, %v1085
        %1102 = vst.msk [vmem:[#allocation3] sm:$0xff] %vm298, %v1086
        %1103 = vst.msk [vmem:[#allocation3 + $0x8] sm:$0xff] %vm298, %v1087
        %1104 = vst.msk [vmem:[#allocation3 + $0x10] sm:$0xff] %vm298, %v1088
        %1105 = vst.msk [vmem:[#allocation3 + $0x18] sm:$0xff] %vm298, %v1089
        %1106 = vst.msk [vmem:[#allocation3 + $0x20] sm:$0xff] %vm298, %v1090
        %1107 = vst.msk [vmem:[#allocation3 + $0x28] sm:$0xff] %vm298, %v1091
        %1108 = vst.msk [vmem:[#allocation3 + $0x30] sm:$0xff] %vm298, %v1092
        %1109 = vst.msk [vmem:[#allocation3 + $0x38] sm:$0xff] %vm298, %v1093
        %1110 = vst.msk [vmem:[#allocation3 + $0x40] sm:$0xff] %vm298, %v1094
        %1111 = vst.msk [vmem:[#allocation3 + $0x48] sm:$0xff] %vm298, %v1095
        %1112 = vst.msk [vmem:[#allocation3 + $0x50] sm:$0xff] %vm298, %v1096
        %1113 = vst.msk [vmem:[#allocation3 + $0x58] sm:$0xff] %vm298, %v1097
        %1114 = vst.msk [vmem:[#allocation3 + $0x60] sm:$0xff] %vm298, %v1098
        %1115 = vst.msk [vmem:[#allocation3 + $0x68] sm:$0xff] %vm298, %v1099
        %1116 = vst.msk [vmem:[#allocation3 + $0x70] sm:$0xff] %vm298, %v1100
        %1117 = vst.msk [vmem:[#allocation3 + $0x78] sm:$0xff] %vm298, %v1101
        %v1118 = vld [vmem:[#allocation4] sm:$0xff]
        %v1119 = vld [vmem:[#allocation4 + $0x8] sm:$0xff]
        %v1120 = vld [vmem:[#allocation4 + $0x10] sm:$0xff]
        %v1121 = vld [vmem:[#allocation4 + $0x18] sm:$0xff]
        %v1122 = vld [vmem:[#allocation4 + $0x20] sm:$0xff]
        %v1123 = vld [vmem:[#allocation4 + $0x28] sm:$0xff]
        %v1124 = vld [vmem:[#allocation4 + $0x30] sm:$0xff]
        %v1125 = vld [vmem:[#allocation4 + $0x38] sm:$0xff]
        %v1126 = vld [vmem:[#allocation4 + $0x40] sm:$0xff]
        %v1127 = vld [vmem:[#allocation4 + $0x48] sm:$0xff]
        %v1128 = vld [vmem:[#allocation4 + $0x50] sm:$0xff]
        %v1129 = vld [vmem:[#allocation4 + $0x58] sm:$0xff]
        %v1130 = vld [vmem:[#allocation4 + $0x60] sm:$0xff]
        %v1131 = vld [vmem:[#allocation4 + $0x68] sm:$0xff]
        %v1132 = vld [vmem:[#allocation4 + $0x70] sm:$0xff]
        %v1133 = vld [vmem:[#allocation4 + $0x78] sm:$0xff]
        %1135 = vset.pattern.permute.xlu0 0
        %1136 = vperm.xlu0 %1135, %v799
        %v1137 = vpop.permute.xlu0 %1136
        %1140 = vset.pattern.permute.xlu0 0
        %1141 = vperm.xlu0 %1140, %v801
        %v1142 = vpop.permute.xlu0 %1141
        %1145 = vset.pattern.permute.xlu0 0
        %1146 = vperm.xlu0 %1145, %v803
        %v1147 = vpop.permute.xlu0 %1146
        %1150 = vset.pattern.permute.xlu0 0
        %1151 = vperm.xlu0 %1150, %v805
        %v1152 = vpop.permute.xlu0 %1151
        %1155 = vset.pattern.permute.xlu0 0
        %1156 = vperm.xlu0 %1155, %v807
        %v1157 = vpop.permute.xlu0 %1156
        %1160 = vset.pattern.permute.xlu0 0
        %1161 = vperm.xlu0 %1160, %v809
        %v1162 = vpop.permute.xlu0 %1161
        %1165 = vset.pattern.permute.xlu0 0
        %1166 = vperm.xlu0 %1165, %v811
        %v1167 = vpop.permute.xlu0 %1166
        %1170 = vset.pattern.permute.xlu0 0
        %1171 = vperm.xlu0 %1170, %v813
        %v1172 = vpop.permute.xlu0 %1171
        %1175 = vset.pattern.permute.xlu0 0
        %1176 = vperm.xlu0 %1175, %v815
        %v1177 = vpop.permute.xlu0 %1176
        %1180 = vset.pattern.permute.xlu0 0
        %1181 = vperm.xlu0 %1180, %v817
        %v1182 = vpop.permute.xlu0 %1181
        %1185 = vset.pattern.permute.xlu0 0
        %1186 = vperm.xlu0 %1185, %v819
        %v1187 = vpop.permute.xlu0 %1186
        %1190 = vset.pattern.permute.xlu0 0
        %1191 = vperm.xlu0 %1190, %v821
        %v1192 = vpop.permute.xlu0 %1191
        %1195 = vset.pattern.permute.xlu0 0
        %1196 = vperm.xlu0 %1195, %v823
        %v1197 = vpop.permute.xlu0 %1196
        %1200 = vset.pattern.permute.xlu0 0
        %1201 = vperm.xlu0 %1200, %v825
        %v1202 = vpop.permute.xlu0 %1201
        %1205 = vset.pattern.permute.xlu0 0
        %1206 = vperm.xlu0 %1205, %v827
        %v1207 = vpop.permute.xlu0 %1206
        %1210 = vset.pattern.permute.xlu0 0
        %1211 = vperm.xlu0 %1210, %v829
        %v1212 = vpop.permute.xlu0 %1211
        %v1214 = vmul.f32 %v1137, %v1118
        %v1215 = vmul.f32 %v1142, %v1119
        %v1216 = vmul.f32 %v1147, %v1120
        %v1217 = vmul.f32 %v1152, %v1121
        %v1218 = vmul.f32 %v1157, %v1122
        %v1219 = vmul.f32 %v1162, %v1123
        %v1220 = vmul.f32 %v1167, %v1124
        %v1221 = vmul.f32 %v1172, %v1125
        %v1222 = vmul.f32 %v1177, %v1126
        %v1223 = vmul.f32 %v1182, %v1127
        %v1224 = vmul.f32 %v1187, %v1128
        %v1225 = vmul.f32 %v1192, %v1129
        %v1226 = vmul.f32 %v1197, %v1130
        %v1227 = vmul.f32 %v1202, %v1131
        %v1228 = vmul.f32 %v1207, %v1132
        %v1229 = vmul.f32 %v1212, %v1133
        %v1230 = vpack.c.bf16 %v947, %v943
        %v1231 = vpack.c.bf16 %v949, %v945
        %v1232 = vpack.c.bf16 %v955, %v951
        %v1233 = vpack.c.bf16 %v957, %v953
        %v1234 = vpack.c.bf16 %v963, %v959
        %v1235 = vpack.c.bf16 %v965, %v961
        %v1236 = vpack.c.bf16 %v971, %v967
        %v1237 = vpack.c.bf16 %v973, %v969
        %v1238 = vpack.c.bf16 %v979, %v975
        %v1239 = vpack.c.bf16 %v981, %v977
        %v1240 = vpack.c.bf16 %v987, %v983
        %v1241 = vpack.c.bf16 %v989, %v985
        %v1242 = vpack.c.bf16 %v995, %v991
        %v1243 = vpack.c.bf16 %v997, %v993
        %v1244 = vpack.c.bf16 %v1003, %v999
        %v1245 = vpack.c.bf16 %v1005, %v1001
        %v1246 = vpack.c.bf16 %v576, %v574
        %v1247 = vpack.c.bf16 %v665, %v663
        %v1248 = vpack.c.bf16 %v581, %v579
        %v1249 = vpack.c.bf16 %v670, %v668
        %v1250 = vpack.c.bf16 %v586, %v584
        %v1251 = vpack.c.bf16 %v675, %v673
        %v1252 = vpack.c.bf16 %v591, %v589
        %v1253 = vpack.c.bf16 %v680, %v678
        %v1254 = vpack.c.bf16 %v596, %v594
        %v1255 = vpack.c.bf16 %v685, %v683
        %v1256 = vpack.c.bf16 %v601, %v599
        %v1257 = vpack.c.bf16 %v690, %v688
        %v1258 = vpack.c.bf16 %v606, %v604
        %v1259 = vpack.c.bf16 %v695, %v693
        %v1260 = vpack.c.bf16 %v611, %v609
        %v1261 = vpack.c.bf16 %v700, %v698
        %1262 = vmatpush.bf16.xpose.msra.mxu0 %v1260
        %1263 = vmatpush.bf16.xpose.msra.mxu0 %v1258
        %1264 = vmatpush.bf16.xpose.msra.mxu0 %v1256
        %1265 = vmatpush.bf16.xpose.msra.mxu0 %v1254
        %1266 = vmatpush.bf16.xpose.msra.mxu0 %v1252
        %1267 = vmatpush.bf16.xpose.msra.mxu0 %v1250
        %1268 = vmatpush.bf16.xpose.msra.mxu0 %v1248
        %1269 = vmatpush.bf16.xpose.msra.mxu0 %v1246
        %1270 = vmatmul.bf16.gmra.mxu0 %v1230
        %v1271 = vpop.f32.mrf.mxu0
        %v1272 = vadd.f32 0.0, %v1271
        %v1273 = vpop.f32.mrf.mxu0
        %v1274 = vadd.f32 0.0, %v1273
        %1275 = vmatmul.bf16.gmra.mxu0 %v1232
        %v1276 = vpop.f32.mrf.mxu0
        %v1277 = vadd.f32 0.0, %v1276
        %v1278 = vpop.f32.mrf.mxu0
        %v1279 = vadd.f32 0.0, %v1278
        %1280 = vmatmul.bf16.gmra.mxu0 %v1234
        %v1281 = vpop.f32.mrf.mxu0
        %v1282 = vadd.f32 0.0, %v1281
        %v1283 = vpop.f32.mrf.mxu0
        %v1284 = vadd.f32 0.0, %v1283
        %1285 = vmatmul.bf16.gmra.mxu0 %v1236
        %v1286 = vpop.f32.mrf.mxu0
        %v1287 = vadd.f32 0.0, %v1286
        %v1288 = vpop.f32.mrf.mxu0
        %v1289 = vadd.f32 0.0, %v1288
        %1290 = vmatmul.bf16.gmra.mxu0 %v1238
        %v1291 = vpop.f32.mrf.mxu0
        %v1292 = vadd.f32 0.0, %v1291
        %v1293 = vpop.f32.mrf.mxu0
        %v1294 = vadd.f32 0.0, %v1293
        %1295 = vmatmul.bf16.gmra.mxu0 %v1240
        %v1296 = vpop.f32.mrf.mxu0
        %v1297 = vadd.f32 0.0, %v1296
        %v1298 = vpop.f32.mrf.mxu0
        %v1299 = vadd.f32 0.0, %v1298
        %1300 = vmatmul.bf16.gmra.mxu0 %v1242
        %v1301 = vpop.f32.mrf.mxu0
        %v1302 = vadd.f32 0.0, %v1301
        %v1303 = vpop.f32.mrf.mxu0
        %v1304 = vadd.f32 0.0, %v1303
        %1305 = vmatmul.bf16.gmra.mxu0 %v1244
        %v1306 = vpop.f32.mrf.mxu0
        %v1307 = vadd.f32 0.0, %v1306
        %v1308 = vpop.f32.mrf.mxu0
        %v1309 = vadd.f32 0.0, %v1308
        %1310 = vdwg.mxu0
        %1311 = vmatpush.bf16.xpose.msra.mxu0 %v1261
        %1312 = vmatpush.bf16.xpose.msra.mxu0 %v1259
        %1313 = vmatpush.bf16.xpose.msra.mxu0 %v1257
        %1314 = vmatpush.bf16.xpose.msra.mxu0 %v1255
        %1315 = vmatpush.bf16.xpose.msra.mxu0 %v1253
        %1316 = vmatpush.bf16.xpose.msra.mxu0 %v1251
        %1317 = vmatpush.bf16.xpose.msra.mxu0 %v1249
        %1318 = vmatpush.bf16.xpose.msra.mxu0 %v1247
        %1319 = vmatmul.bf16.gmra.mxu0 %v1231
        %v1320 = vpop.f32.mrf.mxu0
        %v1321 = vadd.f32 %v1272, %v1320
        %v1322 = vpop.f32.mrf.mxu0
        %v1323 = vadd.f32 %v1274, %v1322
        %1324 = vmatmul.bf16.gmra.mxu0 %v1233
        %v1325 = vpop.f32.mrf.mxu0
        %v1326 = vadd.f32 %v1277, %v1325
        %v1327 = vpop.f32.mrf.mxu0
        %v1328 = vadd.f32 %v1279, %v1327
        %1329 = vmatmul.bf16.gmra.mxu0 %v1235
        %v1330 = vpop.f32.mrf.mxu0
        %v1331 = vadd.f32 %v1282, %v1330
        %v1332 = vpop.f32.mrf.mxu0
        %v1333 = vadd.f32 %v1284, %v1332
        %1334 = vmatmul.bf16.gmra.mxu0 %v1237
        %v1335 = vpop.f32.mrf.mxu0
        %v1336 = vadd.f32 %v1287, %v1335
        %v1337 = vpop.f32.mrf.mxu0
        %v1338 = vadd.f32 %v1289, %v1337
        %1339 = vmatmul.bf16.gmra.mxu0 %v1239
        %v1340 = vpop.f32.mrf.mxu0
        %v1341 = vadd.f32 %v1292, %v1340
        %v1342 = vpop.f32.mrf.mxu0
        %v1343 = vadd.f32 %v1294, %v1342
        %1344 = vmatmul.bf16.gmra.mxu0 %v1241
        %v1345 = vpop.f32.mrf.mxu0
        %v1346 = vadd.f32 %v1297, %v1345
        %v1347 = vpop.f32.mrf.mxu0
        %v1348 = vadd.f32 %v1299, %v1347
        %1349 = vmatmul.bf16.gmra.mxu0 %v1243
        %v1350 = vpop.f32.mrf.mxu0
        %v1351 = vadd.f32 %v1302, %v1350
        %v1352 = vpop.f32.mrf.mxu0
        %v1353 = vadd.f32 %v1304, %v1352
        %1354 = vmatmul.bf16.gmra.mxu0 %v1245
        %v1355 = vpop.f32.mrf.mxu0
        %v1356 = vadd.f32 %v1307, %v1355
        %v1357 = vpop.f32.mrf.mxu0
        %v1358 = vadd.f32 %v1309, %v1357
        %1359 = vdwg.mxu0
        %v1360 = vadd.f32 %v1214, %v1321
        %v1361 = vadd.f32 %v1215, %v1323
        %v1362 = vadd.f32 %v1216, %v1326
        %v1363 = vadd.f32 %v1217, %v1328
        %v1364 = vadd.f32 %v1218, %v1331
        %v1365 = vadd.f32 %v1219, %v1333
        %v1366 = vadd.f32 %v1220, %v1336
        %v1367 = vadd.f32 %v1221, %v1338
        %v1368 = vadd.f32 %v1222, %v1341
        %v1369 = vadd.f32 %v1223, %v1343
        %v1370 = vadd.f32 %v1224, %v1346
        %v1371 = vadd.f32 %v1225, %v1348
        %v1372 = vadd.f32 %v1226, %v1351
        %v1373 = vadd.f32 %v1227, %v1353
        %v1374 = vadd.f32 %v1228, %v1356
        %v1375 = vadd.f32 %v1229, %v1358
        %1376 = vst [vmem:[#allocation4] sm:$0xff] %v1360
        %1377 = vst [vmem:[#allocation4 + $0x8] sm:$0xff] %v1361
        %1378 = vst [vmem:[#allocation4 + $0x10] sm:$0xff] %v1362
        %1379 = vst [vmem:[#allocation4 + $0x18] sm:$0xff] %v1363
        %1380 = vst [vmem:[#allocation4 + $0x20] sm:$0xff] %v1364
        %1381 = vst [vmem:[#allocation4 + $0x28] sm:$0xff] %v1365
        %1382 = vst [vmem:[#allocation4 + $0x30] sm:$0xff] %v1366
        %1383 = vst [vmem:[#allocation4 + $0x38] sm:$0xff] %v1367
        %1384 = vst [vmem:[#allocation4 + $0x40] sm:$0xff] %v1368
        %1385 = vst [vmem:[#allocation4 + $0x48] sm:$0xff] %v1369
        %1386 = vst [vmem:[#allocation4 + $0x50] sm:$0xff] %v1370
        %1387 = vst [vmem:[#allocation4 + $0x58] sm:$0xff] %v1371
        %1388 = vst [vmem:[#allocation4 + $0x60] sm:$0xff] %v1372
        %1389 = vst [vmem:[#allocation4 + $0x68] sm:$0xff] %v1373
        %1390 = vst [vmem:[#allocation4 + $0x70] sm:$0xff] %v1374
        %1391 = vst [vmem:[#allocation4 + $0x78] sm:$0xff] %v1375
        %1392 = vst.msk [vmem:[#allocation2] sm:$0xff] %vm298, %v766
        %1393 = vst.msk [vmem:[#allocation2 + $0x8] sm:$0xff] %vm298, %v767
        %1394 = vst.msk [vmem:[#allocation2 + $0x10] sm:$0xff] %vm298, %v768
        %1395 = vst.msk [vmem:[#allocation2 + $0x18] sm:$0xff] %vm298, %v769
        %1396 = vst.msk [vmem:[#allocation2 + $0x20] sm:$0xff] %vm298, %v770
        %1397 = vst.msk [vmem:[#allocation2 + $0x28] sm:$0xff] %vm298, %v771
        %1398 = vst.msk [vmem:[#allocation2 + $0x30] sm:$0xff] %vm298, %v772
        %1399 = vst.msk [vmem:[#allocation2 + $0x38] sm:$0xff] %vm298, %v773
        %1400 = vst.msk [vmem:[#allocation2 + $0x40] sm:$0xff] %vm298, %v774
        %1401 = vst.msk [vmem:[#allocation2 + $0x48] sm:$0xff] %vm298, %v775
        %1402 = vst.msk [vmem:[#allocation2 + $0x50] sm:$0xff] %vm298, %v776
        %1403 = vst.msk [vmem:[#allocation2 + $0x58] sm:$0xff] %vm298, %v777
        %1404 = vst.msk [vmem:[#allocation2 + $0x60] sm:$0xff] %vm298, %v778
        %1405 = vst.msk [vmem:[#allocation2 + $0x68] sm:$0xff] %vm298, %v779
        %1406 = vst.msk [vmem:[#allocation2 + $0x70] sm:$0xff] %vm298, %v780
        %1407 = vst.msk [vmem:[#allocation2 + $0x78] sm:$0xff] %vm298, %v781
        %v1408 = vld [vmem:[#allocation3] sm:$0xff]
        %v1409 = vld [vmem:[#allocation3 + $0x8] sm:$0xff]
        %v1410 = vld [vmem:[#allocation3 + $0x10] sm:$0xff]
        %v1411 = vld [vmem:[#allocation3 + $0x18] sm:$0xff]
        %v1412 = vld [vmem:[#allocation3 + $0x20] sm:$0xff]
        %v1413 = vld [vmem:[#allocation3 + $0x28] sm:$0xff]
        %v1414 = vld [vmem:[#allocation3 + $0x30] sm:$0xff]
        %v1415 = vld [vmem:[#allocation3 + $0x38] sm:$0xff]
        %v1416 = vld [vmem:[#allocation3 + $0x40] sm:$0xff]
        %v1417 = vld [vmem:[#allocation3 + $0x48] sm:$0xff]
        %v1418 = vld [vmem:[#allocation3 + $0x50] sm:$0xff]
        %v1419 = vld [vmem:[#allocation3 + $0x58] sm:$0xff]
        %v1420 = vld [vmem:[#allocation3 + $0x60] sm:$0xff]
        %v1421 = vld [vmem:[#allocation3 + $0x68] sm:$0xff]
        %v1422 = vld [vmem:[#allocation3 + $0x70] sm:$0xff]
        %v1423 = vld [vmem:[#allocation3 + $0x78] sm:$0xff]
        %v1424 = vrcp.pop %v1408
        %v1425 = vrcp.pop %v1409
        %v1426 = vrcp.pop %v1410
        %v1427 = vrcp.pop %v1411
        %v1428 = vrcp.pop %v1412
        %v1429 = vrcp.pop %v1413
        %v1430 = vrcp.pop %v1414
        %v1431 = vrcp.pop %v1415
        %v1432 = vrcp.pop %v1416
        %v1433 = vrcp.pop %v1417
        %v1434 = vrcp.pop %v1418
        %v1435 = vrcp.pop %v1419
        %v1436 = vrcp.pop %v1420
        %v1437 = vrcp.pop %v1421
        %v1438 = vrcp.pop %v1422
        %v1439 = vrcp.pop %v1423
        %v1440 = vld [vmem:[#allocation4] sm:$0xff]
        %v1441 = vld [vmem:[#allocation4 + $0x8] sm:$0xff]
        %v1442 = vld [vmem:[#allocation4 + $0x10] sm:$0xff]
        %v1443 = vld [vmem:[#allocation4 + $0x18] sm:$0xff]
        %v1444 = vld [vmem:[#allocation4 + $0x20] sm:$0xff]
        %v1445 = vld [vmem:[#allocation4 + $0x28] sm:$0xff]
        %v1446 = vld [vmem:[#allocation4 + $0x30] sm:$0xff]
        %v1447 = vld [vmem:[#allocation4 + $0x38] sm:$0xff]
        %v1448 = vld [vmem:[#allocation4 + $0x40] sm:$0xff]
        %v1449 = vld [vmem:[#allocation4 + $0x48] sm:$0xff]
        %v1450 = vld [vmem:[#allocation4 + $0x50] sm:$0xff]
        %v1451 = vld [vmem:[#allocation4 + $0x58] sm:$0xff]
        %v1452 = vld [vmem:[#allocation4 + $0x60] sm:$0xff]
        %v1453 = vld [vmem:[#allocation4 + $0x68] sm:$0xff]
        %v1454 = vld [vmem:[#allocation4 + $0x70] sm:$0xff]
        %v1455 = vld [vmem:[#allocation4 + $0x78] sm:$0xff]
        %1457 = vset.pattern.permute.xlu0 0
        %1458 = vperm.xlu0 %1457, %v1424
        %v1459 = vpop.permute.xlu0 %1458
        %1462 = vset.pattern.permute.xlu0 0
        %1463 = vperm.xlu0 %1462, %v1425
        %v1464 = vpop.permute.xlu0 %1463
        %1467 = vset.pattern.permute.xlu0 0
        %1468 = vperm.xlu0 %1467, %v1426
        %v1469 = vpop.permute.xlu0 %1468
        %1472 = vset.pattern.permute.xlu0 0
        %1473 = vperm.xlu0 %1472, %v1427
        %v1474 = vpop.permute.xlu0 %1473
        %1477 = vset.pattern.permute.xlu0 0
        %1478 = vperm.xlu0 %1477, %v1428
        %v1479 = vpop.permute.xlu0 %1478
        %1482 = vset.pattern.permute.xlu0 0
        %1483 = vperm.xlu0 %1482, %v1429
        %v1484 = vpop.permute.xlu0 %1483
        %1487 = vset.pattern.permute.xlu0 0
        %1488 = vperm.xlu0 %1487, %v1430
        %v1489 = vpop.permute.xlu0 %1488
        %1492 = vset.pattern.permute.xlu0 0
        %1493 = vperm.xlu0 %1492, %v1431
        %v1494 = vpop.permute.xlu0 %1493
        %1497 = vset.pattern.permute.xlu0 0
        %1498 = vperm.xlu0 %1497, %v1432
        %v1499 = vpop.permute.xlu0 %1498
        %1502 = vset.pattern.permute.xlu0 0
        %1503 = vperm.xlu0 %1502, %v1433
        %v1504 = vpop.permute.xlu0 %1503
        %1507 = vset.pattern.permute.xlu0 0
        %1508 = vperm.xlu0 %1507, %v1434
        %v1509 = vpop.permute.xlu0 %1508
        %1512 = vset.pattern.permute.xlu0 0
        %1513 = vperm.xlu0 %1512, %v1435
        %v1514 = vpop.permute.xlu0 %1513
        %1517 = vset.pattern.permute.xlu0 0
        %1518 = vperm.xlu0 %1517, %v1436
        %v1519 = vpop.permute.xlu0 %1518
        %1522 = vset.pattern.permute.xlu0 0
        %1523 = vperm.xlu0 %1522, %v1437
        %v1524 = vpop.permute.xlu0 %1523
        %1527 = vset.pattern.permute.xlu0 0
        %1528 = vperm.xlu0 %1527, %v1438
        %v1529 = vpop.permute.xlu0 %1528
        %1532 = vset.pattern.permute.xlu0 0
        %1533 = vperm.xlu0 %1532, %v1439
        %v1534 = vpop.permute.xlu0 %1533
        %v1536 = vmul.f32 %v1440, %v1459
        %v1537 = vmul.f32 %v1441, %v1464
        %v1538 = vmul.f32 %v1442, %v1469
        %v1539 = vmul.f32 %v1443, %v1474
        %v1540 = vmul.f32 %v1444, %v1479
        %v1541 = vmul.f32 %v1445, %v1484
        %v1542 = vmul.f32 %v1446, %v1489
        %v1543 = vmul.f32 %v1447, %v1494
        %v1544 = vmul.f32 %v1448, %v1499
        %v1545 = vmul.f32 %v1449, %v1504
        %v1546 = vmul.f32 %v1450, %v1509
        %v1547 = vmul.f32 %v1451, %v1514
        %v1548 = vmul.f32 %v1452, %v1519
        %v1549 = vmul.f32 %v1453, %v1524
        %v1550 = vmul.f32 %v1454, %v1529
        %v1551 = vmul.f32 %v1455, %v1534
        %v1552 = vld [vmem:[%s5] sm:$0xff]
        %v1553 = vld [vmem:[%s5 + $0x8] sm:$0xff]
        %v1554 = vld [vmem:[%s5 + $0x10] sm:$0xff]
        %v1555 = vld [vmem:[%s5 + $0x18] sm:$0xff]
        %v1556 = vld [vmem:[%s5 + $0x20] sm:$0xff]
        %v1557 = vld [vmem:[%s5 + $0x28] sm:$0xff]
        %v1558 = vld [vmem:[%s5 + $0x30] sm:$0xff]
        %v1559 = vld [vmem:[%s5 + $0x38] sm:$0xff]
        %v1560 = vld [vmem:[%s5 + $0x40] sm:$0xff]
        %v1561 = vld [vmem:[%s5 + $0x48] sm:$0xff]
        %v1562 = vld [vmem:[%s5 + $0x50] sm:$0xff]
        %v1563 = vld [vmem:[%s5 + $0x58] sm:$0xff]
        %v1564 = vld [vmem:[%s5 + $0x60] sm:$0xff]
        %v1565 = vld [vmem:[%s5 + $0x68] sm:$0xff]
        %v1566 = vld [vmem:[%s5 + $0x70] sm:$0xff]
        %v1567 = vld [vmem:[%s5 + $0x78] sm:$0xff]
        %v1568 = vmul.f32 %v1536, %v1552
        %v1569 = vmul.f32 %v1537, %v1553
        %v1570 = vmul.f32 %v1538, %v1554
        %v1571 = vmul.f32 %v1539, %v1555
        %v1572 = vmul.f32 %v1540, %v1556
        %v1573 = vmul.f32 %v1541, %v1557
        %v1574 = vmul.f32 %v1542, %v1558
        %v1575 = vmul.f32 %v1543, %v1559
        %v1576 = vmul.f32 %v1544, %v1560
        %v1577 = vmul.f32 %v1545, %v1561
        %v1578 = vmul.f32 %v1546, %v1562
        %v1579 = vmul.f32 %v1547, %v1563
        %v1580 = vmul.f32 %v1548, %v1564
        %v1581 = vmul.f32 %v1549, %v1565
        %v1582 = vmul.f32 %v1550, %v1566
        %v1583 = vmul.f32 %v1551, %v1567
        %v1584 = vld [vmem:[%s4] sm:$0xf]
        %1585 = vmatpush.xpose.msra.mxu0 %v1583
        %1586 = vmatpush.xpose.msra.mxu0 %v1582
        %1587 = vmatpush.xpose.msra.mxu0 %v1581
        %1588 = vmatpush.xpose.msra.mxu0 %v1580
        %1589 = vmatpush.xpose.msra.mxu0 %v1579
        %1590 = vmatpush.xpose.msra.mxu0 %v1578
        %1591 = vmatpush.xpose.msra.mxu0 %v1577
        %1592 = vmatpush.xpose.msra.mxu0 %v1576
        %1593 = vmatpush.xpose.msra.mxu0 %v1575
        %1594 = vmatpush.xpose.msra.mxu0 %v1574
        %1595 = vmatpush.xpose.msra.mxu0 %v1573
        %1596 = vmatpush.xpose.msra.mxu0 %v1572
        %1597 = vmatpush.xpose.msra.mxu0 %v1571
        %1598 = vmatpush.xpose.msra.mxu0 %v1570
        %1599 = vmatpush.xpose.msra.mxu0 %v1569
        %1600 = vmatpush.xpose.msra.mxu0 %v1568
        %1601 = vmatmul.f32.gmra.mxu0 %v1584
        %v1602 = vpop.f32.mrf.mxu0
        %v1603 = vadd.f32 0.0, %v1602
        %1604 = vdwg.mxu0
        %v1605 = vpack.c.bf16 %v1603, %v1603
        %v1606 = vld [vmem:[%s6] sm:$0xf]
        %v1607 = vld [vmem:[%s291] sm:$0xff]
        %1609 = vst [vmem:[#allocation1] ss:$2 sm:$0xff] %v1607
        %v1610 = vld.sshfl [vmem:[#allocation1] sm:$0xff pattern:$0x75316420]
        %v1611 = vld.sshfl [vmem:[#allocation1 + $0x8] sm:$0xff pattern:$0x75316420]
        %v1614 = vpack.c.bf16 %v1610, %v1610
        %v1615 = vpack.c.bf16 %v1611, %v1611
        %v1616 = vld [vmem:[%s2] sm:$0xf]
        %v1617 = vld [vmem:[%s2 + $0x4] sm:$0xf]
        %v1618 = vld [vmem:[%s2 + $0x8] sm:$0xf]
        %v1619 = vld [vmem:[%s2 + $0xc] sm:$0xf]
        %v1620 = vld [vmem:[%s2 + $0x10] sm:$0xf]
        %v1621 = vld [vmem:[%s2 + $0x14] sm:$0xf]
        %v1622 = vld [vmem:[%s2 + $0x18] sm:$0xf]
        %v1623 = vld [vmem:[%s2 + $0x1c] sm:$0xf]
        %v1624 = vld [vmem:[%s2 + $0x20] sm:$0xf]
        %v1625 = vld [vmem:[%s2 + $0x24] sm:$0xf]
        %v1626 = vld [vmem:[%s2 + $0x28] sm:$0xf]
        %v1627 = vld [vmem:[%s2 + $0x2c] sm:$0xf]
        %v1628 = vld [vmem:[%s2 + $0x30] sm:$0xf]
        %v1629 = vld [vmem:[%s2 + $0x34] sm:$0xf]
        %v1630 = vld [vmem:[%s2 + $0x38] sm:$0xf]
        %v1631 = vld [vmem:[%s2 + $0x3c] sm:$0xf]
        %v1648 = vunpack.c.l.b16 %v1616
        %v1649 = vunpack.c.l.b16 %v1617
        %v1650 = vunpack.c.l.b16 %v1618
        %v1651 = vunpack.c.l.b16 %v1619
        %v1652 = vunpack.c.l.b16 %v1620
        %v1653 = vunpack.c.l.b16 %v1621
        %v1654 = vunpack.c.l.b16 %v1622
        %v1655 = vunpack.c.l.b16 %v1623
        %v1656 = vunpack.c.l.b16 %v1624
        %v1657 = vunpack.c.l.b16 %v1625
        %v1658 = vunpack.c.l.b16 %v1626
        %v1659 = vunpack.c.l.b16 %v1627
        %v1660 = vunpack.c.l.b16 %v1628
        %v1661 = vunpack.c.l.b16 %v1629
        %v1662 = vunpack.c.l.b16 %v1630
        %v1663 = vunpack.c.l.b16 %v1631
        %v1664 = vpack.c.b16 %v1649, %v1648
        %v1665 = vpack.c.b16 %v1651, %v1650
        %v1666 = vpack.c.b16 %v1653, %v1652
        %v1667 = vpack.c.b16 %v1655, %v1654
        %v1668 = vpack.c.b16 %v1657, %v1656
        %v1669 = vpack.c.b16 %v1659, %v1658
        %v1670 = vpack.c.b16 %v1661, %v1660
        %v1671 = vpack.c.b16 %v1663, %v1662
        %v1673 = vsel %vm468, %v1664, 0
        %v1676 = vsel %vm468, %v1665, 0
        %v1679 = vsel %vm468, %v1666, 0
        %v1682 = vsel %vm468, %v1667, 0
        %v1685 = vsel %vm468, %v1668, 0
        %v1688 = vsel %vm468, %v1669, 0
        %v1691 = vsel %vm468, %v1670, 0
        %v1694 = vsel %vm468, %v1671, 0
        %v1697 = vsel %vm517, %v1614, 0
        %v1700 = vsel %vm517, %v1615, 0
        %1702 = vmatpush.bf16.msra.mxu0 0
        %1703 = vmatpush.bf16.msra.mxu0 0
        %1704 = vmatpush.bf16.msra.mxu0 0
        %1705 = vmatpush.bf16.msra.mxu0 0
        %1706 = vmatpush.bf16.msra.mxu0 0
        %1707 = vmatpush.bf16.msra.mxu0 0
        %1708 = vmatpush.bf16.msra.mxu0 0
        %1709 = vmatpush.bf16.msra.mxu0 %v1697
        %1710 = vmatmul.bf16.gmra.mxu0 %v1673
        %v1711 = vpop.f32.mrf.mxu0
        %v1712 = vadd.f32 0.0, %v1711
        %v1713 = vpop.f32.mrf.mxu0
        %v1714 = vadd.f32 0.0, %v1713
        %1715 = vmatmul.bf16.gmra.mxu0 %v1676
        %v1716 = vpop.f32.mrf.mxu0
        %v1717 = vadd.f32 0.0, %v1716
        %v1718 = vpop.f32.mrf.mxu0
        %v1719 = vadd.f32 0.0, %v1718
        %1720 = vmatmul.bf16.gmra.mxu0 %v1679
        %v1721 = vpop.f32.mrf.mxu0
        %v1722 = vadd.f32 0.0, %v1721
        %v1723 = vpop.f32.mrf.mxu0
        %v1724 = vadd.f32 0.0, %v1723
        %1725 = vmatmul.bf16.gmra.mxu0 %v1682
        %v1726 = vpop.f32.mrf.mxu0
        %v1727 = vadd.f32 0.0, %v1726
        %v1728 = vpop.f32.mrf.mxu0
        %v1729 = vadd.f32 0.0, %v1728
        %1730 = vmatmul.bf16.gmra.mxu0 %v1685
        %v1731 = vpop.f32.mrf.mxu0
        %v1732 = vadd.f32 0.0, %v1731
        %v1733 = vpop.f32.mrf.mxu0
        %v1734 = vadd.f32 0.0, %v1733
        %1735 = vmatmul.bf16.gmra.mxu0 %v1688
        %v1736 = vpop.f32.mrf.mxu0
        %v1737 = vadd.f32 0.0, %v1736
        %v1738 = vpop.f32.mrf.mxu0
        %v1739 = vadd.f32 0.0, %v1738
        %1740 = vmatmul.bf16.gmra.mxu0 %v1691
        %v1741 = vpop.f32.mrf.mxu0
        %v1742 = vadd.f32 0.0, %v1741
        %v1743 = vpop.f32.mrf.mxu0
        %v1744 = vadd.f32 0.0, %v1743
        %1745 = vmatmul.bf16.gmra.mxu0 %v1694
        %v1746 = vpop.f32.mrf.mxu0
        %v1747 = vadd.f32 0.0, %v1746
        %v1748 = vpop.f32.mrf.mxu0
        %v1749 = vadd.f32 0.0, %v1748
        %1750 = vdwg.mxu0
        %1751 = vmatpush.bf16.msra.mxu0 0
        %1752 = vmatpush.bf16.msra.mxu0 0
        %1753 = vmatpush.bf16.msra.mxu0 0
        %1754 = vmatpush.bf16.msra.mxu0 0
        %1755 = vmatpush.bf16.msra.mxu0 0
        %1756 = vmatpush.bf16.msra.mxu0 0
        %1757 = vmatpush.bf16.msra.mxu0 0
        %1758 = vmatpush.bf16.msra.mxu0 %v1700
        %1759 = vmatmul.bf16.gmra.mxu0 %v1673
        %v1760 = vpop.f32.mrf.mxu0
        %v1761 = vadd.f32 0.0, %v1760
        %v1762 = vpop.f32.mrf.mxu0
        %v1763 = vadd.f32 0.0, %v1762
        %1764 = vmatmul.bf16.gmra.mxu0 %v1676
        %v1765 = vpop.f32.mrf.mxu0
        %v1766 = vadd.f32 0.0, %v1765
        %v1767 = vpop.f32.mrf.mxu0
        %v1768 = vadd.f32 0.0, %v1767
        %1769 = vmatmul.bf16.gmra.mxu0 %v1679
        %v1770 = vpop.f32.mrf.mxu0
        %v1771 = vadd.f32 0.0, %v1770
        %v1772 = vpop.f32.mrf.mxu0
        %v1773 = vadd.f32 0.0, %v1772
        %1774 = vmatmul.bf16.gmra.mxu0 %v1682
        %v1775 = vpop.f32.mrf.mxu0
        %v1776 = vadd.f32 0.0, %v1775
        %v1777 = vpop.f32.mrf.mxu0
        %v1778 = vadd.f32 0.0, %v1777
        %1779 = vmatmul.bf16.gmra.mxu0 %v1685
        %v1780 = vpop.f32.mrf.mxu0
        %v1781 = vadd.f32 0.0, %v1780
        %v1782 = vpop.f32.mrf.mxu0
        %v1783 = vadd.f32 0.0, %v1782
        %1784 = vmatmul.bf16.gmra.mxu0 %v1688
        %v1785 = vpop.f32.mrf.mxu0
        %v1786 = vadd.f32 0.0, %v1785
        %v1787 = vpop.f32.mrf.mxu0
        %v1788 = vadd.f32 0.0, %v1787
        %1789 = vmatmul.bf16.gmra.mxu0 %v1691
        %v1790 = vpop.f32.mrf.mxu0
        %v1791 = vadd.f32 0.0, %v1790
        %v1792 = vpop.f32.mrf.mxu0
        %v1793 = vadd.f32 0.0, %v1792
        %1794 = vmatmul.bf16.gmra.mxu0 %v1694
        %v1795 = vpop.f32.mrf.mxu0
        %v1796 = vadd.f32 0.0, %v1795
        %v1797 = vpop.f32.mrf.mxu0
        %v1798 = vadd.f32 0.0, %v1797
        %1799 = vdwg.mxu0
        %v1800 = vmax.f32 %v1712, %v1714
        %v1801 = vmax.f32 %v1800, %v1717
        %v1802 = vmax.f32 %v1801, %v1719
        %v1803 = vrot.slane %v1802, 4
        %v1804 = vmax.f32 %v1802, %v1803
        %v1805 = vrot.slane %v1804, 2
        %v1806 = vmax.f32 %v1804, %v1805
        %v1807 = vrot.slane %v1806, 1
        %v1808 = vmax.f32 %v1806, %v1807
        %v1809 = vmax.f32 %v1761, %v1763
        %v1810 = vmax.f32 %v1809, %v1766
        %v1811 = vmax.f32 %v1810, %v1768
        %v1812 = vrot.slane %v1811, 4
        %v1813 = vmax.f32 %v1811, %v1812
        %v1814 = vrot.slane %v1813, 2
        %v1815 = vmax.f32 %v1813, %v1814
        %v1816 = vrot.slane %v1815, 1
        %v1817 = vmax.f32 %v1815, %v1816
        %v1818 = vmax.f32 %v1722, %v1724
        %v1819 = vmax.f32 %v1818, %v1727
        %v1820 = vmax.f32 %v1819, %v1729
        %v1821 = vrot.slane %v1820, 4
        %v1822 = vmax.f32 %v1820, %v1821
        %v1823 = vrot.slane %v1822, 2
        %v1824 = vmax.f32 %v1822, %v1823
        %v1825 = vrot.slane %v1824, 1
        %v1826 = vmax.f32 %v1824, %v1825
        %v1827 = vmax.f32 %v1771, %v1773
        %v1828 = vmax.f32 %v1827, %v1776
        %v1829 = vmax.f32 %v1828, %v1778
        %v1830 = vrot.slane %v1829, 4
        %v1831 = vmax.f32 %v1829, %v1830
        %v1832 = vrot.slane %v1831, 2
        %v1833 = vmax.f32 %v1831, %v1832
        %v1834 = vrot.slane %v1833, 1
        %v1835 = vmax.f32 %v1833, %v1834
        %v1836 = vmax.f32 %v1732, %v1734
        %v1837 = vmax.f32 %v1836, %v1737
        %v1838 = vmax.f32 %v1837, %v1739
        %v1839 = vrot.slane %v1838, 4
        %v1840 = vmax.f32 %v1838, %v1839
        %v1841 = vrot.slane %v1840, 2
        %v1842 = vmax.f32 %v1840, %v1841
        %v1843 = vrot.slane %v1842, 1
        %v1844 = vmax.f32 %v1842, %v1843
        %v1845 = vmax.f32 %v1781, %v1783
        %v1846 = vmax.f32 %v1845, %v1786
        %v1847 = vmax.f32 %v1846, %v1788
        %v1848 = vrot.slane %v1847, 4
        %v1849 = vmax.f32 %v1847, %v1848
        %v1850 = vrot.slane %v1849, 2
        %v1851 = vmax.f32 %v1849, %v1850
        %v1852 = vrot.slane %v1851, 1
        %v1853 = vmax.f32 %v1851, %v1852
        %v1854 = vmax.f32 %v1742, %v1744
        %v1855 = vmax.f32 %v1854, %v1747
        %v1856 = vmax.f32 %v1855, %v1749
        %v1857 = vrot.slane %v1856, 4
        %v1858 = vmax.f32 %v1856, %v1857
        %v1859 = vrot.slane %v1858, 2
        %v1860 = vmax.f32 %v1858, %v1859
        %v1861 = vrot.slane %v1860, 1
        %v1862 = vmax.f32 %v1860, %v1861
        %v1863 = vmax.f32 %v1791, %v1793
        %v1864 = vmax.f32 %v1863, %v1796
        %v1865 = vmax.f32 %v1864, %v1798
        %v1866 = vrot.slane %v1865, 4
        %v1867 = vmax.f32 %v1865, %v1866
        %v1868 = vrot.slane %v1867, 2
        %v1869 = vmax.f32 %v1867, %v1868
        %v1870 = vrot.slane %v1869, 1
        %v1871 = vmax.f32 %v1869, %v1870
        %v1872 = vsub.f32 %v1712, %v1808
        %v1873 = vsub.f32 %v1761, %v1817
        %v1874 = vsub.f32 %v1714, %v1808
        %v1875 = vsub.f32 %v1763, %v1817
        %v1876 = vsub.f32 %v1717, %v1808
        %v1877 = vsub.f32 %v1766, %v1817
        %v1878 = vsub.f32 %v1719, %v1808
        %v1879 = vsub.f32 %v1768, %v1817
        %v1880 = vsub.f32 %v1722, %v1826
        %v1881 = vsub.f32 %v1771, %v1835
        %v1882 = vsub.f32 %v1724, %v1826
        %v1883 = vsub.f32 %v1773, %v1835
        %v1884 = vsub.f32 %v1727, %v1826
        %v1885 = vsub.f32 %v1776, %v1835
        %v1886 = vsub.f32 %v1729, %v1826
        %v1887 = vsub.f32 %v1778, %v1835
        %v1888 = vsub.f32 %v1732, %v1844
        %v1889 = vsub.f32 %v1781, %v1853
        %v1890 = vsub.f32 %v1734, %v1844
        %v1891 = vsub.f32 %v1783, %v1853
        %v1892 = vsub.f32 %v1737, %v1844
        %v1893 = vsub.f32 %v1786, %v1853
        %v1894 = vsub.f32 %v1739, %v1844
        %v1895 = vsub.f32 %v1788, %v1853
        %v1896 = vsub.f32 %v1742, %v1862
        %v1897 = vsub.f32 %v1791, %v1871
        %v1898 = vsub.f32 %v1744, %v1862
        %v1899 = vsub.f32 %v1793, %v1871
        %v1900 = vsub.f32 %v1747, %v1862
        %v1901 = vsub.f32 %v1796, %v1871
        %v1902 = vsub.f32 %v1749, %v1862
        %v1903 = vsub.f32 %v1798, %v1871
        %v1904 = vmul.f32 %v1872, 1.442695
        %v1905 = vpow.pop %v1904
        %v1906 = vmul.f32 %v1873, 1.442695
        %v1907 = vpow.pop %v1906
        %v1908 = vmul.f32 %v1874, 1.442695
        %v1909 = vpow.pop %v1908
        %v1910 = vmul.f32 %v1875, 1.442695
        %v1911 = vpow.pop %v1910
        %v1912 = vmul.f32 %v1876, 1.442695
        %v1913 = vpow.pop %v1912
        %v1914 = vmul.f32 %v1877, 1.442695
        %v1915 = vpow.pop %v1914
        %v1916 = vmul.f32 %v1878, 1.442695
        %v1917 = vpow.pop %v1916
        %v1918 = vmul.f32 %v1879, 1.442695
        %v1919 = vpow.pop %v1918
        %v1920 = vmul.f32 %v1880, 1.442695
        %v1921 = vpow.pop %v1920
        %v1922 = vmul.f32 %v1881, 1.442695
        %v1923 = vpow.pop %v1922
        %v1924 = vmul.f32 %v1882, 1.442695
        %v1925 = vpow.pop %v1924
        %v1926 = vmul.f32 %v1883, 1.442695
        %v1927 = vpow.pop %v1926
        %v1928 = vmul.f32 %v1884, 1.442695
        %v1929 = vpow.pop %v1928
        %v1930 = vmul.f32 %v1885, 1.442695
        %v1931 = vpow.pop %v1930
        %v1932 = vmul.f32 %v1886, 1.442695
        %v1933 = vpow.pop %v1932
        %v1934 = vmul.f32 %v1887, 1.442695
        %v1935 = vpow.pop %v1934
        %v1936 = vmul.f32 %v1888, 1.442695
        %v1937 = vpow.pop %v1936
        %v1938 = vmul.f32 %v1889, 1.442695
        %v1939 = vpow.pop %v1938
        %v1940 = vmul.f32 %v1890, 1.442695
        %v1941 = vpow.pop %v1940
        %v1942 = vmul.f32 %v1891, 1.442695
        %v1943 = vpow.pop %v1942
        %v1944 = vmul.f32 %v1892, 1.442695
        %v1945 = vpow.pop %v1944
        %v1946 = vmul.f32 %v1893, 1.442695
        %v1947 = vpow.pop %v1946
        %v1948 = vmul.f32 %v1894, 1.442695
        %v1949 = vpow.pop %v1948
        %v1950 = vmul.f32 %v1895, 1.442695
        %v1951 = vpow.pop %v1950
        %v1952 = vmul.f32 %v1896, 1.442695
        %v1953 = vpow.pop %v1952
        %v1954 = vmul.f32 %v1897, 1.442695
        %v1955 = vpow.pop %v1954
        %v1956 = vmul.f32 %v1898, 1.442695
        %v1957 = vpow.pop %v1956
        %v1958 = vmul.f32 %v1899, 1.442695
        %v1959 = vpow.pop %v1958
        %v1960 = vmul.f32 %v1900, 1.442695
        %v1961 = vpow.pop %v1960
        %v1962 = vmul.f32 %v1901, 1.442695
        %v1963 = vpow.pop %v1962
        %v1964 = vmul.f32 %v1902, 1.442695
        %v1965 = vpow.pop %v1964
        %v1966 = vmul.f32 %v1903, 1.442695
        %v1967 = vpow.pop %v1966
        %v1968 = vadd.f32 %v1905, %v1909
        %v1969 = vadd.f32 %v1968, %v1913
        %v1970 = vadd.f32 %v1969, %v1917
        %v1971 = vrot.slane %v1970, 4
        %v1972 = vadd.f32 %v1970, %v1971
        %v1973 = vrot.slane %v1972, 2
        %v1974 = vadd.f32 %v1972, %v1973
        %v1975 = vrot.slane %v1974, 1
        %v1976 = vadd.f32 %v1974, %v1975
        %v1977 = vadd.f32 %v1907, %v1911
        %v1978 = vadd.f32 %v1977, %v1915
        %v1979 = vadd.f32 %v1978, %v1919
        %v1980 = vrot.slane %v1979, 4
        %v1981 = vadd.f32 %v1979, %v1980
        %v1982 = vrot.slane %v1981, 2
        %v1983 = vadd.f32 %v1981, %v1982
        %v1984 = vrot.slane %v1983, 1
        %v1985 = vadd.f32 %v1983, %v1984
        %v1986 = vadd.f32 %v1921, %v1925
        %v1987 = vadd.f32 %v1986, %v1929
        %v1988 = vadd.f32 %v1987, %v1933
        %v1989 = vrot.slane %v1988, 4
        %v1990 = vadd.f32 %v1988, %v1989
        %v1991 = vrot.slane %v1990, 2
        %v1992 = vadd.f32 %v1990, %v1991
        %v1993 = vrot.slane %v1992, 1
        %v1994 = vadd.f32 %v1992, %v1993
        %v1995 = vadd.f32 %v1923, %v1927
        %v1996 = vadd.f32 %v1995, %v1931
        %v1997 = vadd.f32 %v1996, %v1935
        %v1998 = vrot.slane %v1997, 4
        %v1999 = vadd.f32 %v1997, %v1998
        %v2000 = vrot.slane %v1999, 2
        %v2001 = vadd.f32 %v1999, %v2000
        %v2002 = vrot.slane %v2001, 1
        %v2003 = vadd.f32 %v2001, %v2002
        %v2004 = vadd.f32 %v1937, %v1941
        %v2005 = vadd.f32 %v2004, %v1945
        %v2006 = vadd.f32 %v2005, %v1949
        %v2007 = vrot.slane %v2006, 4
        %v2008 = vadd.f32 %v2006, %v2007
        %v2009 = vrot.slane %v2008, 2
        %v2010 = vadd.f32 %v2008, %v2009
        %v2011 = vrot.slane %v2010, 1
        %v2012 = vadd.f32 %v2010, %v2011
        %v2013 = vadd.f32 %v1939, %v1943
        %v2014 = vadd.f32 %v2013, %v1947
        %v2015 = vadd.f32 %v2014, %v1951
        %v2016 = vrot.slane %v2015, 4
        %v2017 = vadd.f32 %v2015, %v2016
        %v2018 = vrot.slane %v2017, 2
        %v2019 = vadd.f32 %v2017, %v2018
        %v2020 = vrot.slane %v2019, 1
        %v2021 = vadd.f32 %v2019, %v2020
        %v2022 = vadd.f32 %v1953, %v1957
        %v2023 = vadd.f32 %v2022, %v1961
        %v2024 = vadd.f32 %v2023, %v1965
        %v2025 = vrot.slane %v2024, 4
        %v2026 = vadd.f32 %v2024, %v2025
        %v2027 = vrot.slane %v2026, 2
        %v2028 = vadd.f32 %v2026, %v2027
        %v2029 = vrot.slane %v2028, 1
        %v2030 = vadd.f32 %v2028, %v2029
        %v2031 = vadd.f32 %v1955, %v1959
        %v2032 = vadd.f32 %v2031, %v1963
        %v2033 = vadd.f32 %v2032, %v1967
        %v2034 = vrot.slane %v2033, 4
        %v2035 = vadd.f32 %v2033, %v2034
        %v2036 = vrot.slane %v2035, 2
        %v2037 = vadd.f32 %v2035, %v2036
        %v2038 = vrot.slane %v2037, 1
        %v2039 = vadd.f32 %v2037, %v2038
        %v2040 = vrcp.pop %v1976
        %v2041 = vrcp.pop %v1985
        %v2042 = vrcp.pop %v1994
        %v2043 = vrcp.pop %v2003
        %v2044 = vrcp.pop %v2012
        %v2045 = vrcp.pop %v2021
        %v2046 = vrcp.pop %v2030
        %v2047 = vrcp.pop %v2039
        %v2048 = vmul.f32 %v1905, %v2040
        %v2049 = vmul.f32 %v1907, %v2041
        %v2050 = vmul.f32 %v1909, %v2040
        %v2051 = vmul.f32 %v1911, %v2041
        %v2052 = vmul.f32 %v1913, %v2040
        %v2053 = vmul.f32 %v1915, %v2041
        %v2054 = vmul.f32 %v1917, %v2040
        %v2055 = vmul.f32 %v1919, %v2041
        %v2056 = vmul.f32 %v1921, %v2042
        %v2057 = vmul.f32 %v1923, %v2043
        %v2058 = vmul.f32 %v1925, %v2042
        %v2059 = vmul.f32 %v1927, %v2043
        %v2060 = vmul.f32 %v1929, %v2042
        %v2061 = vmul.f32 %v1931, %v2043
        %v2062 = vmul.f32 %v1933, %v2042
        %v2063 = vmul.f32 %v1935, %v2043
        %v2064 = vmul.f32 %v1937, %v2044
        %v2065 = vmul.f32 %v1939, %v2045
        %v2066 = vmul.f32 %v1941, %v2044
        %v2067 = vmul.f32 %v1943, %v2045
        %v2068 = vmul.f32 %v1945, %v2044
        %v2069 = vmul.f32 %v1947, %v2045
        %v2070 = vmul.f32 %v1949, %v2044
        %v2071 = vmul.f32 %v1951, %v2045
        %v2072 = vmul.f32 %v1953, %v2046
        %v2073 = vmul.f32 %v1955, %v2047
        %v2074 = vmul.f32 %v1957, %v2046
        %v2075 = vmul.f32 %v1959, %v2047
        %v2076 = vmul.f32 %v1961, %v2046
        %v2077 = vmul.f32 %v1963, %v2047
        %v2078 = vmul.f32 %v1965, %v2046
        %v2079 = vmul.f32 %v1967, %v2047
        %v2080 = vpack.c.bf16 %v2050, %v2048
        %v2081 = vpack.c.bf16 %v2051, %v2049
        %v2082 = vpack.c.bf16 %v2054, %v2052
        %v2083 = vpack.c.bf16 %v2055, %v2053
        %v2084 = vpack.c.bf16 %v2058, %v2056
        %v2085 = vpack.c.bf16 %v2059, %v2057
        %v2086 = vpack.c.bf16 %v2062, %v2060
        %v2087 = vpack.c.bf16 %v2063, %v2061
        %v2088 = vpack.c.bf16 %v2066, %v2064
        %v2089 = vpack.c.bf16 %v2067, %v2065
        %v2090 = vpack.c.bf16 %v2070, %v2068
        %v2091 = vpack.c.bf16 %v2071, %v2069
        %v2092 = vpack.c.bf16 %v2074, %v2072
        %v2093 = vpack.c.bf16 %v2075, %v2073
        %v2094 = vpack.c.bf16 %v2078, %v2076
        %v2095 = vpack.c.bf16 %v2079, %v2077
        %2097 = vset.pattern.permute.xlu0 0
        %2098 = vperm.xlu0 %2097, %v1606
        %v2099 = vpop.permute.xlu0 %2098
        %2101 = vmatpush.bf16.msra.mxu0 %v2094
        %2102 = vmatpush.bf16.msra.mxu0 %v2092
        %2103 = vmatpush.bf16.msra.mxu0 %v2090
        %2104 = vmatpush.bf16.msra.mxu0 %v2088
        %2105 = vmatpush.bf16.msra.mxu0 %v2086
        %2106 = vmatpush.bf16.msra.mxu0 %v2084
        %2107 = vmatpush.bf16.msra.mxu0 %v2082
        %2108 = vmatpush.bf16.msra.mxu0 %v2080
        %2109 = vmatmul.bf16.gmra.mxu0 %v1605
        %v2110 = vpop.f32.mrf.mxu0
        %v2111 = vadd.f32 %v2099, %v2110
        %v2112 = vpop.f32.mrf.mxu0
        %2113 = vdwg.mxu0
        %2114 = vmatpush.bf16.msra.mxu0 %v2095
        %2115 = vmatpush.bf16.msra.mxu0 %v2093
        %2116 = vmatpush.bf16.msra.mxu0 %v2091
        %2117 = vmatpush.bf16.msra.mxu0 %v2089
        %2118 = vmatpush.bf16.msra.mxu0 %v2087
        %2119 = vmatpush.bf16.msra.mxu0 %v2085
        %2120 = vmatpush.bf16.msra.mxu0 %v2083
        %2121 = vmatpush.bf16.msra.mxu0 %v2081
        %2122 = vmatmul.bf16.gmra.mxu0 %v1605
        %v2123 = vpop.f32.mrf.mxu0
        %v2124 = vadd.f32 %v2099, %v2123
        %v2125 = vpop.f32.mrf.mxu0
        %2126 = vdwg.mxu0
        %v2129 = vrot.slane %v2124, 4
        %vm2130 = vcmask 1043456
        %v2131 = vsel %vm2130, %v2111, %v2129
        %2133 = vst [vmem:[#allocation5] sm:$0xff] %v2131
        %v2134 = vld [vmem:[#allocation5] sm:$0xff]
        %2136 = vst [vmem:[#allocation1] ss:$2 sm:$0xff] %v2134
        %v2137 = vld.sshfl [vmem:[#allocation1] sm:$0xff pattern:$0x75316420]
        %v2138 = vld.sshfl [vmem:[#allocation1 + $0x8] sm:$0xff pattern:$0x75316420]
        %v2141 = vsel %vm2130, %v2137, 0.0
        %v2142 = vsel %vm2130, %v2138, 0.0
        %v2143 = vadd.f32 %v2141, %v2142
        %2144 = vadd.xlane.f32.xlu0 %v2143
        %v2145 = vpop.xlane.xlu0 %2144
        %v2146 = vrot.slane %v2145, 4
        %v2147 = vadd.f32 %v2145, %v2146
        %v2148 = vrot.slane %v2147, 2
        %v2149 = vadd.f32 %v2147, %v2148
        %v2150 = vrot.slane %v2149, 1
        %v2151 = vadd.f32 %v2149, %v2150
        %s2152 = vtos %v2151
        %v2153 = vmul.f32 %v2134, %v2134
        %2155 = vst [vmem:[#allocation1] ss:$2 sm:$0xff] %v2153
        %v2156 = vld.sshfl [vmem:[#allocation1] sm:$0xff pattern:$0x75316420]
        %v2157 = vld.sshfl [vmem:[#allocation1 + $0x8] sm:$0xff pattern:$0x75316420]
        %v2160 = vsel %vm2130, %v2156, 0.0
        %v2161 = vsel %vm2130, %v2157, 0.0
        %v2162 = vadd.f32 %v2160, %v2161
        %2163 = vadd.xlane.f32.xlu0 %v2162
        %v2164 = vpop.xlane.xlu0 %2163
        %v2165 = vrot.slane %v2164, 4
        %v2166 = vadd.f32 %v2164, %v2165
        %v2167 = vrot.slane %v2166, 2
        %v2168 = vadd.f32 %v2166, %v2167
        %v2169 = vrot.slane %v2168, 1
        %v2170 = vadd.f32 %v2168, %v2169
        %s2171 = vtos %v2170
        %s2172 = smul.f32 %s2152, 0.0009765625
        %s2173 = smul.f32 %s2171, 0.0009765625
        %s2174 = smul.f32 %s2172, %s2172
        %s2175 = ssub.f32 %s2173, %s2174
        %s2176 = sadd.f32 %s2175, 1e-05
        %v2177 = vstv %s2176
        %v2178 = vrsqrt.pop %v2177
        %v2179 = vmul.f32 %v2178, %v2177
        %v2180 = vmul.f32 %v2179, %v2178
        %v2181 = vmul.f32 0.5, %v2180
        %v2182 = vsub.f32 1.5, %v2181
        %v2183 = vmul.f32 %v2178, %v2182
        %vm2184 = vweird.f32 %v2177
        %vm2185 = vweird.f32 %v2178
        %vm2186 = vmor %vm2184, %vm2185
        %v2187 = vsel %vm2186, %v2178, %v2183
        %s2188 = vtos %v2187
        %v2189 = vld [vmem:[%s6] sm:$0xf]
        %v2190 = vstv %s2172
        %v2191 = vsub.f32 %v2134, %v2190
        %v2192 = vstv %s2188
        %v2193 = vmul.f32 %v2191, %v2192
        %2195 = vset.pattern.permute.xlu0 1
        %2196 = vperm.xlu0 %2195, %v2189
        %v2197 = vpop.permute.xlu0 %2196
        %v2199 = vunpack.c.l.s4 839922192
        %v2200 = vunpack.c.0.s8 %v2199
        %v2201 = vperm.slane %v2197, %v2200
        %v2203 = vmul.f32 %v2193, %v2201
        %2204 = vset.pattern.permute.xlu0 2
        %2205 = vperm.xlu0 %2204, %v2189
        %v2206 = vpop.permute.xlu0 %2205
        %v2208 = vunpack.c.l.s4 839922192
        %v2209 = vunpack.c.0.s8 %v2208
        %v2210 = vperm.slane %v2206, %v2209
        %v2212 = vadd.f32 %v2203, %v2210
        %v2213 = vld [vmem:[%s291] sm:$0xff]
        %v2214 = vadd.f32 %v2212, %v2213
        %2215 = vst [vmem:[%s286] sm:$0xff] %v2214
        %s2216 = sand.u32 %s186, 1
        %s2217 = scalar_lea.sflag [#allocation7], %s2216
        %s2218 = sand.u32 %s186, 1
        %s2219 = smul.addr %s2218, 8
        %s2220 = scalar_lea.vmem [#allocation6], %s2219
        // Predicated region
        $region49: #{tpu_custom_call.1} parent=47 // pred_check
          %p2221 = pneg %p196
        $region50: #{tpu_custom_call.1} parent=47 // pred_check_branch
          %2223 = sbr.rel (%p2221) target = $region52
        $region51: #{tpu_custom_call.1} parent=47 // pred_region
          %2225 = vsyncadd %s2217, 0
          %s2226 = smul.addr %s21, 2
          %s2227 = smul.addr %s2226, 4
          %s2228 = scalar_lea.hbm %s7, %s2227
          %s2230 = sshll.u32 %s2220, 4
          %s2231 = int_to_ptr.vmem [resolvable:$true] %s2230
          %s2232 = sshll.u32 %s2228, 4
          %s2233 = int_to_ptr.hbm [resolvable:$true] %s2232
          %2235 = dma.vmem_to_hbm [thread:$0]  %s2231, 128, %s2233, %s2217
        $region52: #{tpu_custom_call.1} parent=47 // pred_fallthru
          _
      $region48: #{tpu_custom_call.1} parent=5 // pred_fallthru
        _
      %p2236 = scmp.le.s32.totalorder 2, %s16
      // Predicated region
      $region53: #{tpu_custom_call.1} parent=5 // pred_check
        %p2237 = pneg %p2236
      $region54: #{tpu_custom_call.1} parent=5 // pred_check_branch
        %2239 = sbr.rel (%p2237) target = $region56
      $region55: #{tpu_custom_call.1} parent=5 // pred_region
        %s2240 = ssub.s32 %s16, 2
        // Predicated region
        $region57: #{tpu_custom_call.1} parent=55 // pred_check
          %p2241 = pneg %p202
        $region58: #{tpu_custom_call.1} parent=55 // pred_check_branch
          %2243 = sbr.rel (%p2241) target = $region60
        $region59: #{tpu_custom_call.1} parent=55 // pred_region
          %s2244 = sand.u32 %s187, 1
          %s2245 = scalar_lea.sflag [#allocation7], %s2244
          %s2246 = sand.u32 %s187, 1
          %s2247 = smul.addr %s2246, 8
          %s2248 = scalar_lea.vmem [#allocation6], %s2247
          %2250 = dma.done %s2245, 128
        $region60: #{tpu_custom_call.1} parent=55 // pred_fallthru
          _
      $region56: #{tpu_custom_call.1} parent=5 // pred_fallthru
        _
    $region6: #{tpu_custom_call.1} parent=1 // loop_footer
      %s20 = sadd.s32 1, %s16
    $region7: #{tpu_custom_call.1} parent=1 // loop_footer_branch
      %15 = sbr.rel target = $region3
    $region8: #{tpu_custom_call.1} parent=1 // loop_exit
      _
    %2251 = vsyncpa [#allocation7], 1
    %s2252 = scalar_lea.sflag [#allocation7], 1
    %2253 = vsyncpa %s2252, 1

</llo_original>
